<compile_context>
chip_gen: v7x
topology: tpu7x:2x2x1
jax: 0.10.0
libtpu: 0.0.40
codegen_flags: <defaults>
</compile_context>

<pallas_src>
import jax
import jax.numpy as jnp
from jax import lax
from jax.experimental import pallas as pl
from jax.experimental.pallas import tpu as pltpu
import numpy as np

# ----------------------------- configuration ---------------------------------
B = 2                      # graphs per batch
N = 16                     # nodes per graph (fixed-size synthetic graphs)
FEAT = 16                  # feat_dim + attr_dim (one-hot node tags)
LATENT = (32, 32, 32, 1)   # DGCNN latent_dim
TLD = sum(LATENT)          # total_latent_dim = 97
TLDP = 128                 # lane-dense padded total latent dim
LASTW = TLDP - sum(LATENT[:-1])   # padded width of the last conv layer (=32)
K = 16                     # sortpooling_k  (k <= N)
C1 = 16                    # conv1d_params1 out channels
C2 = 32                    # conv1d_params2 out channels
P2 = K // 2 - 4            # length after maxpool(2,2) and conv1d(kernel=5)  -> 4
DENSE = P2 * C2            # gnn.dense_dim = 128
HIDDEN = 32
NUM_CLASS = 2


# ----------------------------- Pallas kernels --------------------------------
def gconv_fused_kernel(a_ref, x_ref, invd_ref,
                       w0_ref, b0_ref, w1_ref, b1_ref,
                       w2_ref, b2_ref, w3_ref, b3_ref, o_ref):
    """All four DGCNN graph-conv layers fused, whole batch per step.

    a_ref   : (B*N, B*N) block-diagonal (A + I)
    invd_ref: (B*N, 1)   precomputed 1/(deg + 1)
    output  : (B*N, 128) = concat of layer activations, last layer zero-padded 1->32.
    """
    a = a_ref[...]
    inv_deg = invd_ref[...]
    cur = x_ref[...]
    outs = []
    for w_ref, b_ref in ((w0_ref, b0_ref), (w1_ref, b1_ref),
                         (w2_ref, b2_ref), (w3_ref, b3_ref)):
        ax = jnp.dot(a, cur, preferred_element_type=jnp.float32)        # (A+I) X
        lin = jnp.dot(ax, w_ref[...], preferred_element_type=jnp.float32) + b_ref[...]
        cur = jnp.tanh(lin * inv_deg)
        outs.append(cur)
    o_ref[...] = jnp.concatenate(outs, axis=1)                           # (B*N, 128)


def conv_mlp_kernel(sp_ref, w1_ref, b1_ref, w2_ref, b2_ref,
                    wm1_ref, bm1_ref, wm2_ref, bm2_ref, o_ref,
                    c1_scr, mp_scr, c2_scr):
    """Conv1d(1->C1, k=TLD, s=TLD) + ReLU + MaxPool1d(2,2) + Conv1d(C1->C2, k=5) + ReLU
       + channel-major flatten (folded into wm1) + Linear + ReLU + Linear + log_softmax."""
    # conv1d #1 as one matmul over all B*K sortpooled node rows
    x = sp_ref[...]                                                      # (B*K, 128)
    c1 = jnp.dot(x, w1_ref[...], preferred_element_type=jnp.float32) + b1_ref[...]
    c1_scr[...] = jnp.maximum(c1, 0.0)                                   # (B*K, C1)

    # MaxPool1d(2, 2) via strided sublane reads (VPU only, no selection matmuls)
    bkh = (B * K) // 2
    even = c1_scr[pl.ds(0, bkh, stride=2), :]
    odd = c1_scr[pl.ds(1, bkh, stride=2), :]
    mp_scr[...] = jnp.maximum(even, odd)                                 # (B*K//2, C1)

    # conv1d #2 (kernel=5, per graph) as a single im2col matmul
    kh = K // 2
    rows = []
    for g in range(B):
        base = g * kh
        cols = [mp_scr[base + t: base + t + P2, :] for t in range(5)]    # 5 x (P2, C1)
        rows.append(jnp.concatenate(cols, axis=1))                       # (P2, 5*C1)
    im2col = jnp.concatenate(rows, axis=0)                               # (B*P2, 5*C1)
    c2 = jnp.dot(im2col, w2_ref[...], preferred_element_type=jnp.float32) + b2_ref[...]
    c2_scr[...] = jnp.maximum(c2, 0.0)                                   # (B*P2, C2)

    # channel-major flatten: wm1 rows are pre-permuted so a row-major (p, c) layout works
    m = jnp.concatenate(
        [jnp.concatenate([c2_scr[g * P2 + p: g * P2 + p + 1, :] for p in range(P2)],
                         axis=1)
         for g in range(B)], axis=0)                                     # (B, P2*C2)

    # MLPClassifier head: Linear -> ReLU -> Linear -> log_softmax
    h = jnp.maximum(
        jnp.dot(m, wm1_ref[...], preferred_element_type=jnp.float32) + bm1_ref[...], 0.0)
    logits = jnp.dot(h, wm2_ref[...], preferred_element_type=jnp.float32) + bm2_ref[...]
    mx = jnp.max(logits, axis=-1, keepdims=True)
    lse = jnp.log(jnp.sum(jnp.exp(logits - mx), axis=-1, keepdims=True)) + mx
    o_ref[...] = logits - lse


# ----------------------------- wrappers ---------------------------------------
def gconv_fused(ahat, x_flat, inv_deg, w_list, b_list):
    bn, feat = x_flat.shape
    args = [ahat, x_flat, inv_deg]
    specs = [pl.BlockSpec((bn, bn), lambda i: (0, 0)),
             pl.BlockSpec((bn, feat), lambda i: (0, 0)),
             pl.BlockSpec((bn, 1), lambda i: (0, 0))]
    for w, b in zip(w_list, b_list):
        args += [w, b]
        specs += [pl.BlockSpec(w.shape, lambda i: (0, 0)),
                  pl.BlockSpec(b.shape, lambda i: (0, 0))]
    return pl.pallas_call(
        gconv_fused_kernel,
        out_shape=jax.ShapeDtypeStruct((bn, TLDP), jnp.float32),
        grid=(1,),
        in_specs=specs,
        out_specs=pl.BlockSpec((bn, TLDP), lambda i: (0, 0)),
        compiler_params=pltpu.CompilerParams(dimension_semantics=("arbitrary",)),
    )(*args)


def conv_mlp_fused(sp_flat, w1t, b1, w2f, b2, wm1, bm1, wm2, bm2):
    args = (sp_flat, w1t, b1, w2f, b2, wm1, bm1, wm2, bm2)
    return pl.pallas_call(
        conv_mlp_kernel,
        out_shape=jax.ShapeDtypeStruct((B, NUM_CLASS), jnp.float32),
        grid=(1,),
        in_specs=[pl.BlockSpec(a.shape, lambda i: (0, 0)) for a in args],
        out_specs=pl.BlockSpec((B, NUM_CLASS), lambda i: (0, 0)),
        scratch_shapes=[pltpu.VMEM((B * K, C1), jnp.float32),
                        pltpu.VMEM((B * K // 2, C1), jnp.float32),
                        pltpu.VMEM((B * P2, C2), jnp.float32)],
        compiler_params=pltpu.CompilerParams(dimension_semantics=("arbitrary",)),
    )(*args)


# ----------------------------- full forward -----------------------------------
@jax.jit
def classifier_forward(params, adj, node_feat, labels):
    b, n, _ = node_feat.shape
    bn = b * n

    # tiny XLA-side prep: block-diagonal (A+I), 1/(deg+1), weight re-layouts
    eye_n = jnp.eye(n, dtype=jnp.float32)
    a_self = adj + eye_n[None]
    ahat = (jnp.eye(b, dtype=jnp.float32)[:, None, :, None]
            * a_self[:, :, None, :]).reshape(bn, bn)
    inv_deg = (1.0 / (jnp.sum(adj, axis=-1) + 1.0)).reshape(bn, 1)
    x_flat = node_feat.reshape(bn, FEAT)

    w_list, b_list = [], []
    for lv in range(len(LATENT)):
        w_t = params[f"conv_w{lv}"].T                    # PyTorch [out,in] -> [in,out]
        bia = params[f"conv_b{lv}"]
        if lv == len(LATENT) - 1:                        # pad fout 1 -> 32 (lane-dense)
            w_t = jnp.pad(w_t, ((0, 0), (0, LASTW - LATENT[-1])))
            bia = jnp.pad(bia, (0, LASTW - LATENT[-1]))
        w_list.append(w_t)
        b_list.append(bia[None, :])

    # --- fused graph-conv stack (Pallas kernel #1) ---
    cat_flat = gconv_fused(ahat, x_flat, inv_deg, w_list, b_list)    # (B*N, 128)
    cat = cat_flat.reshape(b, n, TLDP)

    # --- SortPooling glue: sort nodes by real last channel, keep top-k ---
    # TODO(synk): the data-dependent top-k node sort/gather stays in XLA glue; there is
    # no clean Pallas TPU equivalent worth writing at these sizes.
    _, topk_idx = lax.top_k(cat[:, :, TLD - 1], K)
    sp = jnp.take_along_axis(cat, topk_idx[:, :, None], axis=1)      # (B, K, 128)
    sp_flat = sp.reshape(b * K, TLDP)

    # conv1d / MLP weight re-layouts (host-side, tiny)
    w1 = params["conv1d1_w"].reshape(C1, TLD)
    w1t_pad = jnp.pad(w1, ((0, 0), (0, TLDP - TLD))).T               # (128, C1)
    w2_flat = jnp.transpose(params["conv1d2_w"], (2, 1, 0)).reshape(5 * C1, C2)
    # fold PyTorch's channel-major .view(B,-1) into the h1 weight
    wm1 = jnp.transpose(params["h1_w"].reshape(HIDDEN, C2, P2), (2, 1, 0)
                        ).reshape(P2 * C2, HIDDEN)                   # (128, HIDDEN)
    wm2 = params["h2_w"].T                                           # (HIDDEN, NUM_CLASS)

    # --- fused conv1d stack + MLP head (Pallas kernel #2) ---
    logp = conv_mlp_fused(sp_flat, w1t_pad, params["conv1d1_b"][None, :],
                          w2_flat, params["conv1d2_b"][None, :],
                          wm1, params["h1_b"][None, :],
                          wm2, params["h2_b"][None, :])              # (B, NUM_CLASS)

    loss = -jnp.mean(logp[jnp.arange(b), labels])                    # F.nll_loss
    pred = jnp.argmax(logp, axis=1)
    acc = jnp.mean((pred == labels).astype(jnp.float32))
    return logp, loss, acc


# ----------------------------- pure-JAX reference ------------------------------
def reference_forward(params, adj, node_feat, labels):
    hi = lax.Precision.HIGHEST
    b = node_feat.shape[0]
    deg = jnp.sum(adj, axis=-1, keepdims=True) + 1.0
    cur = node_feat
    cats = []
    for lv in range(len(LATENT)):
        w = params[f"conv_w{lv}"]
        bias = params[f"conv_b{lv}"]
        ax = jnp.einsum("bij,bjf->bif", adj, cur, precision=hi) + cur
        cur = jnp.tanh((jnp.einsum("bnf,of->bno", ax, w, precision=hi) + bias) / deg)
        cats.append(cur)
    cat = jnp.concatenate(cats, -1)
    _, idx = lax.top_k(cat[:, :, -1], K)
    sp = jnp.take_along_axis(cat, idx[:, :, None], axis=1)
    w1 = params["conv1d1_w"].reshape(C1, TLD)
    c1 = jnp.maximum(jnp.einsum("bkt,ct->bkc", sp, w1, precision=hi)
                     + params["conv1d1_b"], 0.0)
    mp = jnp.max(c1.reshape(b, K // 2, 2, C1), axis=2)               # [B, K//2, C1]
    w2 = params["conv1d2_w"]                                          # [C2, C1, 5]
    outs = [jnp.einsum("btc,dct->bd", mp[:, p:p + 5, :], w2, precision=hi)
            for p in range(P2)]
    c2 = jnp.maximum(jnp.stack(outs, axis=2) + params["conv1d2_b"][None, :, None], 0.0)
    dense = c2.reshape(b, -1)
    embed = jnp.maximum(dense, 0.0)
    h1 = jnp.maximum(embed @ params["h1_w"].T + params["h1_b"], 0.0)
    logits = h1 @ params["h2_w"].T + params["h2_b"]
    logp = jax.nn.log_softmax(logits, axis=1)
    loss = -jnp.mean(logp[jnp.arange(b), labels])
    pred = jnp.argmax(logp, 1)
    acc = jnp.mean((pred == labels).astype(jnp.float32))
    return logp, loss, acc


# ----------------------------- main --------------------------------------------
def init_params(key):
    def dense_init(k, out_d, in_d):
        return jax.random.normal(k, (out_d, in_d), jnp.float32) * (float(in_d) ** -0.5)

    keys = jax.random.split(key, 16)
    params = {}
    in_dims = [FEAT] + list(LATENT[:-1])
    ki = 0
    for lv, (din, dout) in enumerate(zip(in_dims, LATENT)):
        params[f"conv_w{lv}"] = dense_init(keys[ki], dout, din); ki += 1
        params[f"conv_b{lv}"] = jnp.zeros((dout,), jnp.float32)
    params["conv1d1_w"] = (jax.random.normal(keys[ki], (C1, 1, TLD), jnp.float32)
                           * (float(TLD) ** -0.5)); ki += 1
    params["conv1d1_b"] = jnp.zeros((C1,), jnp.float32)
    params["conv1d2_w"] = (jax.random.normal(keys[ki], (C2, C1, 5), jnp.float32)
                           * (float(C1 * 5) ** -0.5)); ki += 1
    params["conv1d2_b"] = jnp.zeros((C2,), jnp.float32)
    params["h1_w"] = dense_init(keys[ki], HIDDEN, DENSE); ki += 1
    params["h1_b"] = jnp.zeros((HIDDEN,), jnp.float32)
    params["h2_w"] = dense_init(keys[ki], NUM_CLASS, HIDDEN); ki += 1
    params["h2_b"] = jnp.zeros((NUM_CLASS,), jnp.float32)
    return params


if __name__ == "__main__":
    root = jax.random.PRNGKey(0)
    k_adj, k_tag, k_lab, k_par = jax.random.split(root, 4)

    # synthetic fixed-size graph batch (replaces PrepareFeatureLabel, host-side glue)
    u = jax.random.uniform(k_adj, (B, N, N))
    sym = 0.5 * (u + jnp.transpose(u, (0, 2, 1)))
    adj = (sym > 0.5).astype(jnp.float32) * (1.0 - jnp.eye(N, dtype=jnp.float32)[None])
    tags = jax.random.randint(k_tag, (B, N), 0, FEAT)
    node_feat = jax.nn.one_hot(tags, FEAT, dtype=jnp.float32)      # one-hot node tags
    labels = jax.random.randint(k_lab, (B,), 0, NUM_CLASS)

    params = init_params(k_par)

    logp, loss, acc = classifier_forward(params, adj, node_feat, labels)
    jax.block_until_ready((logp, loss, acc))

    r_logp, r_loss, r_acc = reference_forward(params, adj, node_feat, labels)
    np.testing.assert_allclose(np.asarray(logp), np.asarray(r_logp), rtol=5e-3, atol=5e-3)
    np.testing.assert_allclose(float(loss), float(r_loss), rtol=5e-3, atol=5e-3)
    assert float(acc) == float(r_acc)

    print("KERNEL_OK")
</pallas_src>

<mosaic_0001>
module attributes {stable_mosaic.version = 11 : i64} {
  func.func @gconv_fused_kernel(%arg0: i32, %arg1: memref<32x32xf32, #tpu.memory_space<vmem>>, %arg2: memref<32x16xf32, #tpu.memory_space<vmem>>, %arg3: memref<32x1xf32, #tpu.memory_space<vmem>>, %arg4: memref<16x32xf32, #tpu.memory_space<vmem>>, %arg5: memref<1x32xf32, #tpu.memory_space<vmem>>, %arg6: memref<32x32xf32, #tpu.memory_space<vmem>>, %arg7: memref<1x32xf32, #tpu.memory_space<vmem>>, %arg8: memref<32x32xf32, #tpu.memory_space<vmem>>, %arg9: memref<1x32xf32, #tpu.memory_space<vmem>>, %arg10: memref<32x32xf32, #tpu.memory_space<vmem>>, %arg11: memref<1x32xf32, #tpu.memory_space<vmem>>, %arg12: memref<32x128xf32, #tpu.memory_space<vmem>>) attributes {dimension_semantics = [#tpu.dimension_semantics<arbitrary>], iteration_bounds = array<i64: 1>, scalar_prefetch = 0 : i64, scratch_operands = 0 : i64, tpu.core_type = #tpu.core_type<tc>, window_params = [{pipeline_mode = #tpu.pipeline_mode<synchronous>, transform_indices = @transform_0, window_bounds = array<i64: 32, 32>}, {pipeline_mode = #tpu.pipeline_mode<synchronous>, transform_indices = @transform_1, window_bounds = array<i64: 32, 16>}, {pipeline_mode = #tpu.pipeline_mode<synchronous>, transform_indices = @transform_2, window_bounds = array<i64: 32, 1>}, {pipeline_mode = #tpu.pipeline_mode<synchronous>, transform_indices = @transform_3, window_bounds = array<i64: 16, 32>}, {pipeline_mode = #tpu.pipeline_mode<synchronous>, transform_indices = @transform_4, window_bounds = array<i64: 1, 32>}, {pipeline_mode = #tpu.pipeline_mode<synchronous>, transform_indices = @transform_5, window_bounds = array<i64: 32, 32>}, {pipeline_mode = #tpu.pipeline_mode<synchronous>, transform_indices = @transform_6, window_bounds = array<i64: 1, 32>}, {pipeline_mode = #tpu.pipeline_mode<synchronous>, transform_indices = @transform_7, window_bounds = array<i64: 32, 32>}, {pipeline_mode = #tpu.pipeline_mode<synchronous>, transform_indices = @transform_8, window_bounds = array<i64: 1, 32>}, {pipeline_mode = #tpu.pipeline_mode<synchronous>, transform_indices = @transform_9, window_bounds = array<i64: 32, 32>}, {pipeline_mode = #tpu.pipeline_mode<synchronous>, transform_indices = @transform_10, window_bounds = array<i64: 1, 32>}, {pipeline_mode = #tpu.pipeline_mode<synchronous>, transform_indices = @transform_11, window_bounds = array<i64: 32, 128>}]} {
    %c0 = arith.constant 0 : index
    %c0_0 = arith.constant 0 : index
    %0 = vector.load %arg1[%c0, %c0_0] : memref<32x32xf32, #tpu.memory_space<vmem>>, vector<32x32xf32>
    %c0_1 = arith.constant 0 : index
    %c0_2 = arith.constant 0 : index
    %1 = vector.load %arg3[%c0_1, %c0_2] : memref<32x1xf32, #tpu.memory_space<vmem>>, vector<32x1xf32>
    %c0_3 = arith.constant 0 : index
    %c0_4 = arith.constant 0 : index
    %2 = vector.load %arg2[%c0_3, %c0_4] : memref<32x16xf32, #tpu.memory_space<vmem>>, vector<32x16xf32>
    %cst = arith.constant dense<0.000000e+00> : vector<32x16xf32>
    %3 = tpu.matmul %0, %2, %cst {dimension_numbers = #tpu.dot_dimension_numbers<[1], [0], [0], [1], [0, 0, 1, 1], [], []>} : vector<32x32xf32>, vector<32x16xf32>, vector<32x16xf32> -> vector<32x16xf32>
    %c0_5 = arith.constant 0 : index
    %c0_6 = arith.constant 0 : index
    %4 = vector.load %arg4[%c0_5, %c0_6] : memref<16x32xf32, #tpu.memory_space<vmem>>, vector<16x32xf32>
    %cst_7 = arith.constant dense<0.000000e+00> : vector<32x32xf32>
    %5 = tpu.matmul %3, %4, %cst_7 {dimension_numbers = #tpu.dot_dimension_numbers<[1], [0], [0], [1], [0, 0, 1, 1], [], []>} : vector<32x16xf32>, vector<16x32xf32>, vector<32x32xf32> -> vector<32x32xf32>
    %c0_8 = arith.constant 0 : index
    %c0_9 = arith.constant 0 : index
    %6 = vector.load %arg5[%c0_8, %c0_9] : memref<1x32xf32, #tpu.memory_space<vmem>>, vector<1x32xf32>
    %7 = vector.broadcast %6 : vector<1x32xf32> to vector<32x32xf32>
    %8 = arith.addf %5, %7 : vector<32x32xf32>
    %9 = vector.broadcast %1 : vector<32x1xf32> to vector<32x32xf32>
    %10 = arith.mulf %8, %9 : vector<32x32xf32>
    %11 = math.tanh %10 : vector<32x32xf32>
    %cst_10 = arith.constant dense<0.000000e+00> : vector<32x32xf32>
    %12 = tpu.matmul %0, %11, %cst_10 {dimension_numbers = #tpu.dot_dimension_numbers<[1], [0], [0], [1], [0, 0, 1, 1], [], []>} : vector<32x32xf32>, vector<32x32xf32>, vector<32x32xf32> -> vector<32x32xf32>
    %c0_11 = arith.constant 0 : index
    %c0_12 = arith.constant 0 : index
    %13 = vector.load %arg6[%c0_11, %c0_12] : memref<32x32xf32, #tpu.memory_space<vmem>>, vector<32x32xf32>
    %cst_13 = arith.constant dense<0.000000e+00> : vector<32x32xf32>
    %14 = tpu.matmul %12, %13, %cst_13 {dimension_numbers = #tpu.dot_dimension_numbers<[1], [0], [0], [1], [0, 0, 1, 1], [], []>} : vector<32x32xf32>, vector<32x32xf32>, vector<32x32xf32> -> vector<32x32xf32>
    %c0_14 = arith.constant 0 : index
    %c0_15 = arith.constant 0 : index
    %15 = vector.load %arg7[%c0_14, %c0_15] : memref<1x32xf32, #tpu.memory_space<vmem>>, vector<1x32xf32>
    %16 = vector.broadcast %15 : vector<1x32xf32> to vector<32x32xf32>
    %17 = arith.addf %14, %16 : vector<32x32xf32>
    %18 = vector.broadcast %1 : vector<32x1xf32> to vector<32x32xf32>
    %19 = arith.mulf %17, %18 : vector<32x32xf32>
    %20 = math.tanh %19 : vector<32x32xf32>
    %cst_16 = arith.constant dense<0.000000e+00> : vector<32x32xf32>
    %21 = tpu.matmul %0, %20, %cst_16 {dimension_numbers = #tpu.dot_dimension_numbers<[1], [0], [0], [1], [0, 0, 1, 1], [], []>} : vector<32x32xf32>, vector<32x32xf32>, vector<32x32xf32> -> vector<32x32xf32>
    %c0_17 = arith.constant 0 : index
    %c0_18 = arith.constant 0 : index
    %22 = vector.load %arg8[%c0_17, %c0_18] : memref<32x32xf32, #tpu.memory_space<vmem>>, vector<32x32xf32>
    %cst_19 = arith.constant dense<0.000000e+00> : vector<32x32xf32>
    %23 = tpu.matmul %21, %22, %cst_19 {dimension_numbers = #tpu.dot_dimension_numbers<[1], [0], [0], [1], [0, 0, 1, 1], [], []>} : vector<32x32xf32>, vector<32x32xf32>, vector<32x32xf32> -> vector<32x32xf32>
    %c0_20 = arith.constant 0 : index
    %c0_21 = arith.constant 0 : index
    %24 = vector.load %arg9[%c0_20, %c0_21] : memref<1x32xf32, #tpu.memory_space<vmem>>, vector<1x32xf32>
    %25 = vector.broadcast %24 : vector<1x32xf32> to vector<32x32xf32>
    %26 = arith.addf %23, %25 : vector<32x32xf32>
    %27 = vector.broadcast %1 : vector<32x1xf32> to vector<32x32xf32>
    %28 = arith.mulf %26, %27 : vector<32x32xf32>
    %29 = math.tanh %28 : vector<32x32xf32>
    %cst_22 = arith.constant dense<0.000000e+00> : vector<32x32xf32>
    %30 = tpu.matmul %0, %29, %cst_22 {dimension_numbers = #tpu.dot_dimension_numbers<[1], [0], [0], [1], [0, 0, 1, 1], [], []>} : vector<32x32xf32>, vector<32x32xf32>, vector<32x32xf32> -> vector<32x32xf32>
    %c0_23 = arith.constant 0 : index
    %c0_24 = arith.constant 0 : index
    %31 = vector.load %arg10[%c0_23, %c0_24] : memref<32x32xf32, #tpu.memory_space<vmem>>, vector<32x32xf32>
    %cst_25 = arith.constant dense<0.000000e+00> : vector<32x32xf32>
    %32 = tpu.matmul %30, %31, %cst_25 {dimension_numbers = #tpu.dot_dimension_numbers<[1], [0], [0], [1], [0, 0, 1, 1], [], []>} : vector<32x32xf32>, vector<32x32xf32>, vector<32x32xf32> -> vector<32x32xf32>
    %c0_26 = arith.constant 0 : index
    %c0_27 = arith.constant 0 : index
    %33 = vector.load %arg11[%c0_26, %c0_27] : memref<1x32xf32, #tpu.memory_space<vmem>>, vector<1x32xf32>
    %34 = vector.broadcast %33 : vector<1x32xf32> to vector<32x32xf32>
    %35 = arith.addf %32, %34 : vector<32x32xf32>
    %36 = vector.broadcast %1 : vector<32x1xf32> to vector<32x32xf32>
    %37 = arith.mulf %35, %36 : vector<32x32xf32>
    %38 = math.tanh %37 : vector<32x32xf32>
    %39 = tpu.concatenate %11, %20, %29, %38 in 1 : vector<32x32xf32>, vector<32x32xf32>, vector<32x32xf32>, vector<32x32xf32> -> vector<32x128xf32>
    %c0_28 = arith.constant 0 : index
    %c0_29 = arith.constant 0 : index
    %40 = vector.load %arg12[%c0_28, %c0_29] : memref<32x128xf32, #tpu.memory_space<vmem>>, vector<32x128xf32>
    tpu.vector_store %arg12[%c0_28, %c0_29], %39 {strides = array<i32>} : memref<32x128xf32, #tpu.memory_space<vmem>>, vector<32x128xf32>,
    return
  }
  func.func @transform_0(%arg0: i32) -> (i32, i32) {
    %c0_i32 = arith.constant 0 : i32
    %c0_i32_0 = arith.constant 0 : i32
    %c0_i32_1 = arith.constant 0 : i32
    return %c0_i32, %c0_i32_0 : i32, i32
  }
  func.func @transform_1(%arg0: i32) -> (i32, i32) {
    %c0_i32 = arith.constant 0 : i32
    %c0_i32_0 = arith.constant 0 : i32
    %c0_i32_1 = arith.constant 0 : i32
    return %c0_i32, %c0_i32_0 : i32, i32
  }
  func.func @transform_2(%arg0: i32) -> (i32, i32) {
    %c0_i32 = arith.constant 0 : i32
    %c0_i32_0 = arith.constant 0 : i32
    %c0_i32_1 = arith.constant 0 : i32
    return %c0_i32, %c0_i32_0 : i32, i32
  }
  func.func @transform_3(%arg0: i32) -> (i32, i32) {
    %c0_i32 = arith.constant 0 : i32
    %c0_i32_0 = arith.constant 0 : i32
    %c0_i32_1 = arith.constant 0 : i32
    return %c0_i32, %c0_i32_0 : i32, i32
  }
  func.func @transform_4(%arg0: i32) -> (i32, i32) {
    %c0_i32 = arith.constant 0 : i32
    %c0_i32_0 = arith.constant 0 : i32
    %c0_i32_1 = arith.constant 0 : i32
    return %c0_i32, %c0_i32_0 : i32, i32
  }
  func.func @transform_5(%arg0: i32) -> (i32, i32) {
    %c0_i32 = arith.constant 0 : i32
    %c0_i32_0 = arith.constant 0 : i32
    %c0_i32_1 = arith.constant 0 : i32
    return %c0_i32, %c0_i32_0 : i32, i32
  }
  func.func @transform_6(%arg0: i32) -> (i32, i32) {
    %c0_i32 = arith.constant 0 : i32
    %c0_i32_0 = arith.constant 0 : i32
    %c0_i32_1 = arith.constant 0 : i32
    return %c0_i32, %c0_i32_0 : i32, i32
  }
  func.func @transform_7(%arg0: i32) -> (i32, i32) {
    %c0_i32 = arith.constant 0 : i32
    %c0_i32_0 = arith.constant 0 : i32
    %c0_i32_1 = arith.constant 0 : i32
    return %c0_i32, %c0_i32_0 : i32, i32
  }
  func.func @transform_8(%arg0: i32) -> (i32, i32) {
    %c0_i32 = arith.constant 0 : i32
    %c0_i32_0 = arith.constant 0 : i32
    %c0_i32_1 = arith.constant 0 : i32
    return %c0_i32, %c0_i32_0 : i32, i32
  }
  func.func @transform_9(%arg0: i32) -> (i32, i32) {
    %c0_i32 = arith.constant 0 : i32
    %c0_i32_0 = arith.constant 0 : i32
    %c0_i32_1 = arith.constant 0 : i32
    return %c0_i32, %c0_i32_0 : i32, i32
  }
  func.func @transform_10(%arg0: i32) -> (i32, i32) {
    %c0_i32 = arith.constant 0 : i32
    %c0_i32_0 = arith.constant 0 : i32
    %c0_i32_1 = arith.constant 0 : i32
    return %c0_i32, %c0_i32_0 : i32, i32
  }
  func.func @transform_11(%arg0: i32) -> (i32, i32) {
    %c0_i32 = arith.constant 0 : i32
    %c0_i32_0 = arith.constant 0 : i32
    %c0_i32_1 = arith.constant 0 : i32
    return %c0_i32, %c0_i32_0 : i32, i32
  }
}

module attributes {stable_mosaic.version = 11 : i64} {
  func.func @conv_mlp_kernel(%arg0: i32, %arg1: memref<32x128xf32, #tpu.memory_space<vmem>>, %arg2: memref<128x16xf32, #tpu.memory_space<vmem>>, %arg3: memref<1x16xf32, #tpu.memory_space<vmem>>, %arg4: memref<80x32xf32, #tpu.memory_space<vmem>>, %arg5: memref<1x32xf32, #tpu.memory_space<vmem>>, %arg6: memref<128x32xf32, #tpu.memory_space<vmem>>, %arg7: memref<1x32xf32, #tpu.memory_space<vmem>>, %arg8: memref<32x2xf32, #tpu.memory_space<vmem>>, %arg9: memref<1x2xf32, #tpu.memory_space<vmem>>, %arg10: memref<2x2xf32, #tpu.memory_space<vmem>>, %arg11: memref<32x16xf32, #tpu.memory_space<vmem>>, %arg12: memref<16x16xf32, #tpu.memory_space<vmem>>, %arg13: memref<8x32xf32, #tpu.memory_space<vmem>>) attributes {dimension_semantics = [#tpu.dimension_semantics<arbitrary>], iteration_bounds = array<i64: 1>, scalar_prefetch = 0 : i64, scratch_operands = 3 : i64, tpu.core_type = #tpu.core_type<tc>, window_params = [{pipeline_mode = #tpu.pipeline_mode<synchronous>, transform_indices = @transform_0, window_bounds = array<i64: 32, 128>}, {pipeline_mode = #tpu.pipeline_mode<synchronous>, transform_indices = @transform_1, window_bounds = array<i64: 128, 16>}, {pipeline_mode = #tpu.pipeline_mode<synchronous>, transform_indices = @transform_2, window_bounds = array<i64: 1, 16>}, {pipeline_mode = #tpu.pipeline_mode<synchronous>, transform_indices = @transform_3, window_bounds = array<i64: 80, 32>}, {pipeline_mode = #tpu.pipeline_mode<synchronous>, transform_indices = @transform_4, window_bounds = array<i64: 1, 32>}, {pipeline_mode = #tpu.pipeline_mode<synchronous>, transform_indices = @transform_5, window_bounds = array<i64: 128, 32>}, {pipeline_mode = #tpu.pipeline_mode<synchronous>, transform_indices = @transform_6, window_bounds = array<i64: 1, 32>}, {pipeline_mode = #tpu.pipeline_mode<synchronous>, transform_indices = @transform_7, window_bounds = array<i64: 32, 2>}, {pipeline_mode = #tpu.pipeline_mode<synchronous>, transform_indices = @transform_8, window_bounds = array<i64: 1, 2>}, {pipeline_mode = #tpu.pipeline_mode<synchronous>, transform_indices = @transform_9, window_bounds = array<i64: 2, 2>}]} {
    %c0 = arith.constant 0 : index
    %c0_0 = arith.constant 0 : index
    %0 = vector.load %arg1[%c0, %c0_0] : memref<32x128xf32, #tpu.memory_space<vmem>>, vector<32x128xf32>
    %c0_1 = arith.constant 0 : index
    %c0_2 = arith.constant 0 : index
    %1 = vector.load %arg2[%c0_1, %c0_2] : memref<128x16xf32, #tpu.memory_space<vmem>>, vector<128x16xf32>
    %cst = arith.constant dense<0.000000e+00> : vector<32x16xf32>
    %2 = tpu.matmul %0, %1, %cst {dimension_numbers = #tpu.dot_dimension_numbers<[1], [0], [0], [1], [0, 0, 1, 1], [], []>} : vector<32x128xf32>, vector<128x16xf32>, vector<32x16xf32> -> vector<32x16xf32>
    %c0_3 = arith.constant 0 : index
    %c0_4 = arith.constant 0 : index
    %3 = vector.load %arg3[%c0_3, %c0_4] : memref<1x16xf32, #tpu.memory_space<vmem>>, vector<1x16xf32>
    %4 = vector.broadcast %3 : vector<1x16xf32> to vector<32x16xf32>
    %5 = arith.addf %2, %4 : vector<32x16xf32>
    %cst_5 = arith.constant 0.000000e+00 : f32
    %6 = vector.broadcast %cst_5 : f32 to vector<32x16xf32>
    %7 = arith.maximumf %5, %6 : vector<32x16xf32>
    %c0_6 = arith.constant 0 : index
    %c0_7 = arith.constant 0 : index
    %8 = vector.load %arg11[%c0_6, %c0_7] : memref<32x16xf32, #tpu.memory_space<vmem>>, vector<32x16xf32>
    tpu.vector_store %arg11[%c0_6, %c0_7], %7 {strides = array<i32>} : memref<32x16xf32, #tpu.memory_space<vmem>>, vector<32x16xf32>,
    %c0_8 = arith.constant 0 : index
    %c0_9 = arith.constant 0 : index
    %9 = tpu.strided_load %arg11[%c0_8, %c0_9] {strides = array<i32: 2, 1>} : memref<32x16xf32, #tpu.memory_space<vmem>>, vector<16x16xf32>
    %c1 = arith.constant 1 : index
    %c0_10 = arith.constant 0 : index
    %10 = tpu.strided_load %arg11[%c1, %c0_10] {strides = array<i32: 2, 1>} : memref<32x16xf32, #tpu.memory_space<vmem>>, vector<16x16xf32>
    %11 = arith.maximumf %9, %10 : vector<16x16xf32>
    %c0_11 = arith.constant 0 : index
    %c0_12 = arith.constant 0 : index
    %12 = vector.load %arg12[%c0_11, %c0_12] : memref<16x16xf32, #tpu.memory_space<vmem>>, vector<16x16xf32>
    tpu.vector_store %arg12[%c0_11, %c0_12], %11 {strides = array<i32>} : memref<16x16xf32, #tpu.memory_space<vmem>>, vector<16x16xf32>,
    %c0_13 = arith.constant 0 : index
    %c0_14 = arith.constant 0 : index
    %13 = vector.load %arg12[%c0_13, %c0_14] : memref<16x16xf32, #tpu.memory_space<vmem>>, vector<4x16xf32>
    %c1_15 = arith.constant 1 : index
    %c0_16 = arith.constant 0 : index
    %14 = vector.load %arg12[%c1_15, %c0_16] : memref<16x16xf32, #tpu.memory_space<vmem>>, vector<4x16xf32>
    %c2 = arith.constant 2 : index
    %c0_17 = arith.constant 0 : index
    %15 = vector.load %arg12[%c2, %c0_17] : memref<16x16xf32, #tpu.memory_space<vmem>>, vector<4x16xf32>
    %c3 = arith.constant 3 : index
    %c0_18 = arith.constant 0 : index
    %16 = vector.load %arg12[%c3, %c0_18] : memref<16x16xf32, #tpu.memory_space<vmem>>, vector<4x16xf32>
    %c4 = arith.constant 4 : index
    %c0_19 = arith.constant 0 : index
    %17 = vector.load %arg12[%c4, %c0_19] : memref<16x16xf32, #tpu.memory_space<vmem>>, vector<4x16xf32>
    %18 = tpu.concatenate %13, %14, %15, %16, %17 in 1 : vector<4x16xf32>, vector<4x16xf32>, vector<4x16xf32>, vector<4x16xf32>, vector<4x16xf32> -> vector<4x80xf32>
    %c8 = arith.constant 8 : index
    %c0_20 = arith.constant 0 : index
    %19 = vector.load %arg12[%c8, %c0_20] : memref<16x16xf32, #tpu.memory_space<vmem>>, vector<4x16xf32>
    %c9 = arith.constant 9 : index
    %c0_21 = arith.constant 0 : index
    %20 = vector.load %arg12[%c9, %c0_21] : memref<16x16xf32, #tpu.memory_space<vmem>>, vector<4x16xf32>
    %c10 = arith.constant 10 : index
    %c0_22 = arith.constant 0 : index
    %21 = vector.load %arg12[%c10, %c0_22] : memref<16x16xf32, #tpu.memory_space<vmem>>, vector<4x16xf32>
    %c11 = arith.constant 11 : index
    %c0_23 = arith.constant 0 : index
    %22 = vector.load %arg12[%c11, %c0_23] : memref<16x16xf32, #tpu.memory_space<vmem>>, vector<4x16xf32>
    %c12 = arith.constant 12 : index
    %c0_24 = arith.constant 0 : index
    %23 = vector.load %arg12[%c12, %c0_24] : memref<16x16xf32, #tpu.memory_space<vmem>>, vector<4x16xf32>
    %24 = tpu.concatenate %19, %20, %21, %22, %23 in 1 : vector<4x16xf32>, vector<4x16xf32>, vector<4x16xf32>, vector<4x16xf32>, vector<4x16xf32> -> vector<4x80xf32>
    %25 = tpu.concatenate %18, %24 in 0 : vector<4x80xf32>, vector<4x80xf32> -> vector<8x80xf32>
    %c0_25 = arith.constant 0 : index
    %c0_26 = arith.constant 0 : index
    %26 = vector.load %arg4[%c0_25, %c0_26] : memref<80x32xf32, #tpu.memory_space<vmem>>, vector<80x32xf32>
    %cst_27 = arith.constant dense<0.000000e+00> : vector<8x32xf32>
    %27 = tpu.matmul %25, %26, %cst_27 {dimension_numbers = #tpu.dot_dimension_numbers<[1], [0], [0], [1], [0, 0, 1, 1], [], []>} : vector<8x80xf32>, vector<80x32xf32>, vector<8x32xf32> -> vector<8x32xf32>
    %c0_28 = arith.constant 0 : index
    %c0_29 = arith.constant 0 : index
    %28 = vector.load %arg5[%c0_28, %c0_29] : memref<1x32xf32, #tpu.memory_space<vmem>>, vector<1x32xf32>
    %29 = vector.broadcast %28 : vector<1x32xf32> to vector<8x32xf32>
    %30 = arith.addf %27, %29 : vector<8x32xf32>
    %cst_30 = arith.constant 0.000000e+00 : f32
    %31 = vector.broadcast %cst_30 : f32 to vector<8x32xf32>
    %32 = arith.maximumf %30, %31 : vector<8x32xf32>
    %c0_31 = arith.constant 0 : index
    %c0_32 = arith.constant 0 : index
    %33 = vector.load %arg13[%c0_31, %c0_32] : memref<8x32xf32, #tpu.memory_space<vmem>>, vector<8x32xf32>
    tpu.vector_store %arg13[%c0_31, %c0_32], %32 {strides = array<i32>} : memref<8x32xf32, #tpu.memory_space<vmem>>, vector<8x32xf32>,
    %c0_33 = arith.constant 0 : index
    %c0_34 = arith.constant 0 : index
    %34 = vector.load %arg13[%c0_33, %c0_34] : memref<8x32xf32, #tpu.memory_space<vmem>>, vector<1x32xf32>
    %c1_35 = arith.constant 1 : index
    %c0_36 = arith.constant 0 : index
    %35 = vector.load %arg13[%c1_35, %c0_36] : memref<8x32xf32, #tpu.memory_space<vmem>>, vector<1x32xf32>
    %c2_37 = arith.constant 2 : index
    %c0_38 = arith.constant 0 : index
    %36 = vector.load %arg13[%c2_37, %c0_38] : memref<8x32xf32, #tpu.memory_space<vmem>>, vector<1x32xf32>
    %c3_39 = arith.constant 3 : index
    %c0_40 = arith.constant 0 : index
    %37 = vector.load %arg13[%c3_39, %c0_40] : memref<8x32xf32, #tpu.memory_space<vmem>>, vector<1x32xf32>
    %38 = tpu.concatenate %34, %35, %36, %37 in 1 : vector<1x32xf32>, vector<1x32xf32>, vector<1x32xf32>, vector<1x32xf32> -> vector<1x128xf32>
    %c4_41 = arith.constant 4 : index
    %c0_42 = arith.constant 0 : index
    %39 = vector.load %arg13[%c4_41, %c0_42] : memref<8x32xf32, #tpu.memory_space<vmem>>, vector<1x32xf32>
    %c5 = arith.constant 5 : index
    %c0_43 = arith.constant 0 : index
    %40 = vector.load %arg13[%c5, %c0_43] : memref<8x32xf32, #tpu.memory_space<vmem>>, vector<1x32xf32>
    %c6 = arith.constant 6 : index
    %c0_44 = arith.constant 0 : index
    %41 = vector.load %arg13[%c6, %c0_44] : memref<8x32xf32, #tpu.memory_space<vmem>>, vector<1x32xf32>
    %c7 = arith.constant 7 : index
    %c0_45 = arith.constant 0 : index
    %42 = vector.load %arg13[%c7, %c0_45] : memref<8x32xf32, #tpu.memory_space<vmem>>, vector<1x32xf32>
    %43 = tpu.concatenate %39, %40, %41, %42 in 1 : vector<1x32xf32>, vector<1x32xf32>, vector<1x32xf32>, vector<1x32xf32> -> vector<1x128xf32>
    %44 = tpu.concatenate %38, %43 in 0 : vector<1x128xf32>, vector<1x128xf32> -> vector<2x128xf32>
    %c0_46 = arith.constant 0 : index
    %c0_47 = arith.constant 0 : index
    %45 = vector.load %arg6[%c0_46, %c0_47] : memref<128x32xf32, #tpu.memory_space<vmem>>, vector<128x32xf32>
    %cst_48 = arith.constant dense<0.000000e+00> : vector<2x32xf32>
    %46 = tpu.matmul %44, %45, %cst_48 {dimension_numbers = #tpu.dot_dimension_numbers<[1], [0], [0], [1], [0, 0, 1, 1], [], []>} : vector<2x128xf32>, vector<128x32xf32>, vector<2x32xf32> -> vector<2x32xf32>
    %c0_49 = arith.constant 0 : index
    %c0_50 = arith.constant 0 : index
    %47 = vector.load %arg7[%c0_49, %c0_50] : memref<1x32xf32, #tpu.memory_space<vmem>>, vector<1x32xf32>
    %48 = vector.broadcast %47 : vector<1x32xf32> to vector<2x32xf32>
    %49 = arith.addf %46, %48 : vector<2x32xf32>
    %cst_51 = arith.constant 0.000000e+00 : f32
    %50 = vector.broadcast %cst_51 : f32 to vector<2x32xf32>
    %51 = arith.maximumf %49, %50 : vector<2x32xf32>
    %c0_52 = arith.constant 0 : index
    %c0_53 = arith.constant 0 : index
    %52 = vector.load %arg8[%c0_52, %c0_53] : memref<32x2xf32, #tpu.memory_space<vmem>>, vector<32x2xf32>
    %cst_54 = arith.constant dense<0.000000e+00> : vector<2x2xf32>
    %53 = tpu.matmul %51, %52, %cst_54 {dimension_numbers = #tpu.dot_dimension_numbers<[1], [0], [0], [1], [0, 0, 1, 1], [], []>} : vector<2x32xf32>, vector<32x2xf32>, vector<2x2xf32> -> vector<2x2xf32>
    %c0_55 = arith.constant 0 : index
    %c0_56 = arith.constant 0 : index
    %54 = vector.load %arg9[%c0_55, %c0_56] : memref<1x2xf32, #tpu.memory_space<vmem>>, vector<1x2xf32>
    %55 = vector.broadcast %54 : vector<1x2xf32> to vector<2x2xf32>
    %56 = arith.addf %53, %55 : vector<2x2xf32>
    %cst_57 = arith.constant dense<0xFF800000> : vector<2xf32>
    %57 = vector.multi_reduction <maximumf>, %56, %cst_57 [1] : vector<2x2xf32> to vector<2xf32>
    %58 = vector.shape_cast %57 : vector<2xf32> to vector<2x1xf32>
    %59 = vector.broadcast %58 : vector<2x1xf32> to vector<2x2xf32>
    %60 = arith.subf %56, %59 : vector<2x2xf32>
    %61 = math.exp %60 : vector<2x2xf32>
    %cst_58 = arith.constant dense<0.000000e+00> : vector<2xf32>
    %62 = vector.multi_reduction <add>, %61, %cst_58 [1] : vector<2x2xf32> to vector<2xf32>
    %63 = vector.shape_cast %62 : vector<2xf32> to vector<2x1xf32>
    %64 = math.log %63 : vector<2x1xf32>
    %65 = arith.addf %64, %58 : vector<2x1xf32>
    %66 = vector.broadcast %65 : vector<2x1xf32> to vector<2x2xf32>
    %67 = arith.subf %56, %66 : vector<2x2xf32>
    %c0_59 = arith.constant 0 : index
    %c0_60 = arith.constant 0 : index
    %68 = vector.load %arg10[%c0_59, %c0_60] : memref<2x2xf32, #tpu.memory_space<vmem>>, vector<2x2xf32>
    tpu.vector_store %arg10[%c0_59, %c0_60], %67 {strides = array<i32>} : memref<2x2xf32, #tpu.memory_space<vmem>>, vector<2x2xf32>,
    return
  }
  func.func @transform_0(%arg0: i32) -> (i32, i32) {
    %c0_i32 = arith.constant 0 : i32
    %c0_i32_0 = arith.constant 0 : i32
    %c0_i32_1 = arith.constant 0 : i32
    return %c0_i32, %c0_i32_0 : i32, i32
  }
  func.func @transform_1(%arg0: i32) -> (i32, i32) {
    %c0_i32 = arith.constant 0 : i32
    %c0_i32_0 = arith.constant 0 : i32
    %c0_i32_1 = arith.constant 0 : i32
    return %c0_i32, %c0_i32_0 : i32, i32
  }
  func.func @transform_2(%arg0: i32) -> (i32, i32) {
    %c0_i32 = arith.constant 0 : i32
    %c0_i32_0 = arith.constant 0 : i32
    %c0_i32_1 = arith.constant 0 : i32
    return %c0_i32, %c0_i32_0 : i32, i32
  }
  func.func @transform_3(%arg0: i32) -> (i32, i32) {
    %c0_i32 = arith.constant 0 : i32
    %c0_i32_0 = arith.constant 0 : i32
    %c0_i32_1 = arith.constant 0 : i32
    return %c0_i32, %c0_i32_0 : i32, i32
  }
  func.func @transform_4(%arg0: i32) -> (i32, i32) {
    %c0_i32 = arith.constant 0 : i32
    %c0_i32_0 = arith.constant 0 : i32
    %c0_i32_1 = arith.constant 0 : i32
    return %c0_i32, %c0_i32_0 : i32, i32
  }
  func.func @transform_5(%arg0: i32) -> (i32, i32) {
    %c0_i32 = arith.constant 0 : i32
    %c0_i32_0 = arith.constant 0 : i32
    %c0_i32_1 = arith.constant 0 : i32
    return %c0_i32, %c0_i32_0 : i32, i32
  }
  func.func @transform_6(%arg0: i32) -> (i32, i32) {
    %c0_i32 = arith.constant 0 : i32
    %c0_i32_0 = arith.constant 0 : i32
    %c0_i32_1 = arith.constant 0 : i32
    return %c0_i32, %c0_i32_0 : i32, i32
  }
  func.func @transform_7(%arg0: i32) -> (i32, i32) {
    %c0_i32 = arith.constant 0 : i32
    %c0_i32_0 = arith.constant 0 : i32
    %c0_i32_1 = arith.constant 0 : i32
    return %c0_i32, %c0_i32_0 : i32, i32
  }
  func.func @transform_8(%arg0: i32) -> (i32, i32) {
    %c0_i32 = arith.constant 0 : i32
    %c0_i32_0 = arith.constant 0 : i32
    %c0_i32_1 = arith.constant 0 : i32
    return %c0_i32, %c0_i32_0 : i32, i32
  }
  func.func @transform_9(%arg0: i32) -> (i32, i32) {
    %c0_i32 = arith.constant 0 : i32
    %c0_i32_0 = arith.constant 0 : i32
    %c0_i32_1 = arith.constant 0 : i32
    return %c0_i32, %c0_i32_0 : i32, i32
  }
}

</mosaic_0001>

<llo_original>
// kernel: classifier_forward.2
$region0: #{classifier_forward.2}
  #allocation0 [shape = 'u32[]', space=smem, size = 0x4, offset = 0x4, fixed_abs, tag = 'smem constant byte address 0x4 - core index']
  #allocation1 [shape = 'u32[144,128]{1,0:T(1,128)}', space=vmem, size = 0x12000, scoped, tag = 'internal scratch']
  %s0 = inlined_call_operand.vmem [shape: f32[32,32], index: 0, kind: input, shape index: {}]
  %s1 = inlined_call_operand.vmem [shape: f32[32,16], index: 1, kind: input, shape index: {}]
  %s2 = inlined_call_operand.vmem [shape: f32[32,1], index: 2, kind: input, shape index: {}]
  %s3 = inlined_call_operand.vmem [shape: f32[16,32], index: 3, kind: input, shape index: {}]
  %s4 = inlined_call_operand.vmem [shape: f32[1,32], index: 4, kind: input, shape index: {}]
  %s5 = inlined_call_operand.vmem [shape: f32[32,32], index: 5, kind: input, shape index: {}]
  %s6 = inlined_call_operand.vmem [shape: f32[1,32], index: 6, kind: input, shape index: {}]
  %s7 = inlined_call_operand.vmem [shape: f32[32,32], index: 7, kind: input, shape index: {}]
  %s8 = inlined_call_operand.vmem [shape: f32[1,32], index: 8, kind: input, shape index: {}]
  %s9 = inlined_call_operand.vmem [shape: f32[32,32], index: 9, kind: input, shape index: {}]
  %s10 = inlined_call_operand.vmem [shape: f32[1,32], index: 10, kind: input, shape index: {}]
  %s11 = inlined_call_operand.vmem [shape: f32[32,128], index: 11, kind: output, shape index: {}]
  %s12 = sld [smem:[#allocation0]]
  $region54: #{classifier_forward.2} parent=0
    _
  %s14 = ssub.s32 1, %s12
  %s15 = scalar_select 0, %s14, %s12
  // Predicated region
  $region2: #{classifier_forward.2} parent=0 // pred_check
    _
  $region3: #{classifier_forward.2} parent=0 // pred_check_branch
    %17 = sbr.rel (0) target = $region5
  $region4: #{classifier_forward.2} parent=0 // pred_region
    _
  $region5: #{classifier_forward.2} parent=0 // pred_fallthru
    _
  // Predicated region
  $region6: #{classifier_forward.2} parent=0 // pred_check
    _
  $region7: #{classifier_forward.2} parent=0 // pred_check_branch
    %19 = sbr.rel (0) target = $region9
  $region8: #{classifier_forward.2} parent=0 // pred_region
    _
  $region9: #{classifier_forward.2} parent=0 // pred_fallthru
    _
  // Predicated region
  $region10: #{classifier_forward.2} parent=0 // pred_check
    _
  $region11: #{classifier_forward.2} parent=0 // pred_check_branch
    %21 = sbr.rel (0) target = $region13
  $region12: #{classifier_forward.2} parent=0 // pred_region
    _
  $region13: #{classifier_forward.2} parent=0 // pred_fallthru
    _
  // Predicated region
  $region14: #{classifier_forward.2} parent=0 // pred_check
    _
  $region15: #{classifier_forward.2} parent=0 // pred_check_branch
    %23 = sbr.rel (0) target = $region17
  $region16: #{classifier_forward.2} parent=0 // pred_region
    _
  $region17: #{classifier_forward.2} parent=0 // pred_fallthru
    _
  // Predicated region
  $region18: #{classifier_forward.2} parent=0 // pred_check
    _
  $region19: #{classifier_forward.2} parent=0 // pred_check_branch
    %25 = sbr.rel (0) target = $region21
  $region20: #{classifier_forward.2} parent=0 // pred_region
    _
  $region21: #{classifier_forward.2} parent=0 // pred_fallthru
    _
  // Predicated region
  $region22: #{classifier_forward.2} parent=0 // pred_check
    _
  $region23: #{classifier_forward.2} parent=0 // pred_check_branch
    %27 = sbr.rel (0) target = $region25
  $region24: #{classifier_forward.2} parent=0 // pred_region
    _
  $region25: #{classifier_forward.2} parent=0 // pred_fallthru
    _
  // Predicated region
  $region26: #{classifier_forward.2} parent=0 // pred_check
    _
  $region27: #{classifier_forward.2} parent=0 // pred_check_branch
    %29 = sbr.rel (0) target = $region29
  $region28: #{classifier_forward.2} parent=0 // pred_region
    _
  $region29: #{classifier_forward.2} parent=0 // pred_fallthru
    _
  // Predicated region
  $region30: #{classifier_forward.2} parent=0 // pred_check
    _
  $region31: #{classifier_forward.2} parent=0 // pred_check_branch
    %31 = sbr.rel (0) target = $region33
  $region32: #{classifier_forward.2} parent=0 // pred_region
    _
  $region33: #{classifier_forward.2} parent=0 // pred_fallthru
    _
  // Predicated region
  $region34: #{classifier_forward.2} parent=0 // pred_check
    _
  $region35: #{classifier_forward.2} parent=0 // pred_check_branch
    %33 = sbr.rel (0) target = $region37
  $region36: #{classifier_forward.2} parent=0 // pred_region
    _
  $region37: #{classifier_forward.2} parent=0 // pred_fallthru
    _
  // Predicated region
  $region38: #{classifier_forward.2} parent=0 // pred_check
    _
  $region39: #{classifier_forward.2} parent=0 // pred_check_branch
    %35 = sbr.rel (0) target = $region41
  $region40: #{classifier_forward.2} parent=0 // pred_region
    _
  $region41: #{classifier_forward.2} parent=0 // pred_fallthru
    _
  // Predicated region
  $region42: #{classifier_forward.2} parent=0 // pred_check
    _
  $region43: #{classifier_forward.2} parent=0 // pred_check_branch
    %37 = sbr.rel (0) target = $region45
  $region44: #{classifier_forward.2} parent=0 // pred_region
    _
  $region45: #{classifier_forward.2} parent=0 // pred_fallthru
    _
  %v38 = vld [vmem:[%s0] sm:$0xff]
  %v39 = vld [vmem:[%s0 + $0x8] sm:$0xff]
  %v40 = vld [vmem:[%s0 + $0x10] sm:$0xff]
  %v41 = vld [vmem:[%s0 + $0x18] sm:$0xff]
  %v42 = vld [vmem:[%s2] sm:$0xff]
  %v43 = vld [vmem:[%s2 + $0x8] sm:$0xff]
  %v44 = vld [vmem:[%s2 + $0x10] sm:$0xff]
  %v45 = vld [vmem:[%s2 + $0x18] sm:$0xff]
  %v46 = vld [vmem:[%s1] sm:$0xff]
  %v47 = vld [vmem:[%s1 + $0x8] sm:$0xff]
  %v48 = vld [vmem:[%s1 + $0x10] sm:$0xff]
  %v49 = vld [vmem:[%s1 + $0x18] sm:$0xff]
  %vm50 = vcmask 261120
  %v52 = vsel %vm50, %v38, 0
  %v55 = vsel %vm50, %v39, 0
  %v58 = vsel %vm50, %v40, 0
  %v61 = vsel %vm50, %v41, 0
  %63 = vmatprep.subr.mxu0 0.0
  %64 = vmatpush1.msra.mxu0 %v46
  %65 = vmatprep.subr.mxu0 0.0
  %66 = vmatpush1.msra.mxu0 %v47
  %67 = vmatprep.subr.mxu0 0.0
  %68 = vmatpush1.msra.mxu0 %v48
  %69 = vmatprep.subr.mxu0 0.0
  %70 = vmatpush1.msra.mxu0 %v49
  %71 = vmatprep.subr.mxu0 0.0
  %72 = vmatpush1.msra.mxu0 0.0
  %73 = vmatprep.subr.mxu0 0.0
  %74 = vmatpush1.msra.mxu0 0.0
  %75 = vmatprep.subr.mxu0 0.0
  %76 = vmatpush1.msra.mxu0 0.0
  %77 = vmatprep.subr.mxu0 0.0
  %78 = vmatpush1.msra.mxu0 0.0
  %79 = vmatprep.subr.mxu0 0.0
  %80 = vmatpush1.msra.mxu0 0.0
  %81 = vmatprep.subr.mxu0 0.0
  %82 = vmatpush1.msra.mxu0 0.0
  %83 = vmatprep.subr.mxu0 0.0
  %84 = vmatpush1.msra.mxu0 0.0
  %85 = vmatprep.subr.mxu0 0.0
  %86 = vmatpush1.msra.mxu0 0.0
  %87 = vmatprep.subr.mxu0 0.0
  %88 = vmatpush1.msra.mxu0 0.0
  %89 = vmatprep.subr.mxu0 0.0
  %90 = vmatpush1.msra.mxu0 0.0
  %91 = vmatprep.subr.mxu0 0.0
  %92 = vmatpush1.msra.mxu0 0.0
  %93 = vmatprep.subr.mxu0 0.0
  %94 = vmatpush1.msra.mxu0 0.0
  %95 = vmatprep.subr.mxu0 0.0
  %96 = vmatpush1.msra.mxu0 0.0
  %97 = vmatprep.subr.mxu0 0.0
  %98 = vmatpush1.msra.mxu0 0.0
  %99 = vmatprep.subr.mxu0 0.0
  %100 = vmatpush1.msra.mxu0 0.0
  %101 = vmatprep.subr.mxu0 0.0
  %102 = vmatpush1.msra.mxu0 0.0
  %103 = vmatprep.subr.mxu0 0.0
  %104 = vmatpush1.msra.mxu0 0.0
  %105 = vmatprep.subr.mxu0 0.0
  %106 = vmatpush1.msra.mxu0 0.0
  %107 = vmatprep.subr.mxu0 0.0
  %108 = vmatpush1.msra.mxu0 0.0
  %109 = vmatprep.subr.mxu0 0.0
  %110 = vmatpush1.msra.mxu0 0.0
  %111 = vmatprep.subr.mxu0 0.0
  %112 = vmatpush1.msra.mxu0 0.0
  %113 = vmatprep.subr.mxu0 0.0
  %114 = vmatpush1.msra.mxu0 0.0
  %115 = vmatprep.subr.mxu0 0.0
  %116 = vmatpush1.msra.mxu0 0.0
  %117 = vmatprep.subr.mxu0 0.0
  %118 = vmatpush1.msra.mxu0 0.0
  %119 = vmatprep.subr.mxu0 0.0
  %120 = vmatpush1.msra.mxu0 0.0
  %121 = vmatprep.subr.mxu0 0.0
  %122 = vmatpush1.msra.mxu0 0.0
  %123 = vmatprep.subr.mxu0 0.0
  %124 = vmatpush1.msra.mxu0 0.0
  %125 = vmatprep.subr.mxu0 0.0
  %126 = vmatpush1.msra.mxu0 0.0
  %127 = vmatprep.mubr.f32.mxu0 0.0
  %128 = vmatmul.mubr.f32.gmra.mrb[0].mxu0 %v52
  %v129 = vpop.f32.mrb[0].mxu0
  %v130 = vadd.f32 0.0, %v129
  %v131 = vpop.f32.mrb[0].mxu0
  %132 = vmatprep.mubr.f32.mxu0 0.0
  %133 = vmatmul.mubr.f32.gmra.mrb[0].mxu0 %v55
  %v134 = vpop.f32.mrb[0].mxu0
  %v135 = vadd.f32 0.0, %v134
  %v136 = vpop.f32.mrb[0].mxu0
  %137 = vmatprep.mubr.f32.mxu0 0.0
  %138 = vmatmul.mubr.f32.gmra.mrb[0].mxu0 %v58
  %v139 = vpop.f32.mrb[0].mxu0
  %v140 = vadd.f32 0.0, %v139
  %v141 = vpop.f32.mrb[0].mxu0
  %142 = vmatprep.mubr.f32.mxu0 0.0
  %143 = vmatmul.mubr.f32.gmra.mrb[0].mxu0 %v61
  %v144 = vpop.f32.mrb[0].mxu0
  %v145 = vadd.f32 0.0, %v144
  %v146 = vpop.f32.mrb[0].mxu0
  %147 = vdwg.mxu0
  %v148 = vld [vmem:[%s3] sm:$0xff]
  %v149 = vld [vmem:[%s3 + $0x8] sm:$0xff]
  %v150 = vld [vmem:[%s4] sm:$0x1]
  %v152 = vlaneseq
  %v153 = vshrl.u32 %v152, 7
  %v154 = vsub.s32 0, %v153
  %v155 = vrot.slane %v150, %v154
  %vm157 = vcmask 130048
  %v159 = vsel %vm157, %v130, 0
  %v162 = vsel %vm157, %v135, 0
  %v165 = vsel %vm157, %v140, 0
  %v168 = vsel %vm157, %v145, 0
  %170 = vmatprep.subr.mxu0 0.0
  %171 = vmatpush1.msra.mxu0 %v148
  %172 = vmatprep.subr.mxu0 0.0
  %173 = vmatpush1.msra.mxu0 %v149
  %174 = vmatprep.subr.mxu0 0.0
  %175 = vmatpush1.msra.mxu0 0.0
  %176 = vmatprep.subr.mxu0 0.0
  %177 = vmatpush1.msra.mxu0 0.0
  %178 = vmatprep.subr.mxu0 0.0
  %179 = vmatpush1.msra.mxu0 0.0
  %180 = vmatprep.subr.mxu0 0.0
  %181 = vmatpush1.msra.mxu0 0.0
  %182 = vmatprep.subr.mxu0 0.0
  %183 = vmatpush1.msra.mxu0 0.0
  %184 = vmatprep.subr.mxu0 0.0
  %185 = vmatpush1.msra.mxu0 0.0
  %186 = vmatprep.subr.mxu0 0.0
  %187 = vmatpush1.msra.mxu0 0.0
  %188 = vmatprep.subr.mxu0 0.0
  %189 = vmatpush1.msra.mxu0 0.0
  %190 = vmatprep.subr.mxu0 0.0
  %191 = vmatpush1.msra.mxu0 0.0
  %192 = vmatprep.subr.mxu0 0.0
  %193 = vmatpush1.msra.mxu0 0.0
  %194 = vmatprep.subr.mxu0 0.0
  %195 = vmatpush1.msra.mxu0 0.0
  %196 = vmatprep.subr.mxu0 0.0
  %197 = vmatpush1.msra.mxu0 0.0
  %198 = vmatprep.subr.mxu0 0.0
  %199 = vmatpush1.msra.mxu0 0.0
  %200 = vmatprep.subr.mxu0 0.0
  %201 = vmatpush1.msra.mxu0 0.0
  %202 = vmatprep.subr.mxu0 0.0
  %203 = vmatpush1.msra.mxu0 0.0
  %204 = vmatprep.subr.mxu0 0.0
  %205 = vmatpush1.msra.mxu0 0.0
  %206 = vmatprep.subr.mxu0 0.0
  %207 = vmatpush1.msra.mxu0 0.0
  %208 = vmatprep.subr.mxu0 0.0
  %209 = vmatpush1.msra.mxu0 0.0
  %210 = vmatprep.subr.mxu0 0.0
  %211 = vmatpush1.msra.mxu0 0.0
  %212 = vmatprep.subr.mxu0 0.0
  %213 = vmatpush1.msra.mxu0 0.0
  %214 = vmatprep.subr.mxu0 0.0
  %215 = vmatpush1.msra.mxu0 0.0
  %216 = vmatprep.subr.mxu0 0.0
  %217 = vmatpush1.msra.mxu0 0.0
  %218 = vmatprep.subr.mxu0 0.0
  %219 = vmatpush1.msra.mxu0 0.0
  %220 = vmatprep.subr.mxu0 0.0
  %221 = vmatpush1.msra.mxu0 0.0
  %222 = vmatprep.subr.mxu0 0.0
  %223 = vmatpush1.msra.mxu0 0.0
  %224 = vmatprep.subr.mxu0 0.0
  %225 = vmatpush1.msra.mxu0 0.0
  %226 = vmatprep.subr.mxu0 0.0
  %227 = vmatpush1.msra.mxu0 0.0
  %228 = vmatprep.subr.mxu0 0.0
  %229 = vmatpush1.msra.mxu0 0.0
  %230 = vmatprep.subr.mxu0 0.0
  %231 = vmatpush1.msra.mxu0 0.0
  %232 = vmatprep.subr.mxu0 0.0
  %233 = vmatpush1.msra.mxu0 0.0
  %234 = vmatprep.mubr.f32.mxu0 0.0
  %235 = vmatmul.mubr.f32.gmra.mrb[0].mxu0 %v159
  %v236 = vpop.f32.mrb[0].mxu0
  %v237 = vadd.f32 %v155, %v236
  %v238 = vpop.f32.mrb[0].mxu0
  %239 = vmatprep.mubr.f32.mxu0 0.0
  %240 = vmatmul.mubr.f32.gmra.mrb[0].mxu0 %v162
  %v241 = vpop.f32.mrb[0].mxu0
  %v242 = vadd.f32 %v155, %v241
  %v243 = vpop.f32.mrb[0].mxu0
  %244 = vmatprep.mubr.f32.mxu0 0.0
  %245 = vmatmul.mubr.f32.gmra.mrb[0].mxu0 %v165
  %v246 = vpop.f32.mrb[0].mxu0
  %v247 = vadd.f32 %v155, %v246
  %v248 = vpop.f32.mrb[0].mxu0
  %249 = vmatprep.mubr.f32.mxu0 0.0
  %250 = vmatmul.mubr.f32.gmra.mrb[0].mxu0 %v168
  %v251 = vpop.f32.mrb[0].mxu0
  %v252 = vadd.f32 %v155, %v251
  %v253 = vpop.f32.mrb[0].mxu0
  %254 = vdwg.mxu0
  %256 = vset.pattern.permute.xlu0 0
  %257 = vperm.xlu0 %256, %v42
  %v258 = vpop.permute.xlu0 %257
  %261 = vset.pattern.permute.xlu0 0
  %262 = vperm.xlu0 %261, %v43
  %v263 = vpop.permute.xlu0 %262
  %266 = vset.pattern.permute.xlu0 0
  %267 = vperm.xlu0 %266, %v44
  %v268 = vpop.permute.xlu0 %267
  %271 = vset.pattern.permute.xlu0 0
  %272 = vperm.xlu0 %271, %v45
  %v273 = vpop.permute.xlu0 %272
  %v275 = vmul.f32 %v237, %v258
  %v276 = vmul.f32 %v242, %v263
  %v277 = vmul.f32 %v247, %v268
  %v278 = vmul.f32 %v252, %v273
  %v279 = vtanh.pop %v275
  %v280 = vtanh.pop %v276
  %v281 = vtanh.pop %v277
  %v282 = vtanh.pop %v278
  %283 = vmatprep.subr.mxu0 0.0
  %284 = vmatpush1.msra.mxu0 %v279
  %285 = vmatprep.subr.mxu0 0.0
  %286 = vmatpush1.msra.mxu0 %v280
  %287 = vmatprep.subr.mxu0 0.0
  %288 = vmatpush1.msra.mxu0 %v281
  %289 = vmatprep.subr.mxu0 0.0
  %290 = vmatpush1.msra.mxu0 %v282
  %291 = vmatprep.subr.mxu0 0.0
  %292 = vmatpush1.msra.mxu0 0.0
  %293 = vmatprep.subr.mxu0 0.0
  %294 = vmatpush1.msra.mxu0 0.0
  %295 = vmatprep.subr.mxu0 0.0
  %296 = vmatpush1.msra.mxu0 0.0
  %297 = vmatprep.subr.mxu0 0.0
  %298 = vmatpush1.msra.mxu0 0.0
  %299 = vmatprep.subr.mxu0 0.0
  %300 = vmatpush1.msra.mxu0 0.0
  %301 = vmatprep.subr.mxu0 0.0
  %302 = vmatpush1.msra.mxu0 0.0
  %303 = vmatprep.subr.mxu0 0.0
  %304 = vmatpush1.msra.mxu0 0.0
  %305 = vmatprep.subr.mxu0 0.0
  %306 = vmatpush1.msra.mxu0 0.0
  %307 = vmatprep.subr.mxu0 0.0
  %308 = vmatpush1.msra.mxu0 0.0
  %309 = vmatprep.subr.mxu0 0.0
  %310 = vmatpush1.msra.mxu0 0.0
  %311 = vmatprep.subr.mxu0 0.0
  %312 = vmatpush1.msra.mxu0 0.0
  %313 = vmatprep.subr.mxu0 0.0
  %314 = vmatpush1.msra.mxu0 0.0
  %315 = vmatprep.subr.mxu0 0.0
  %316 = vmatpush1.msra.mxu0 0.0
  %317 = vmatprep.subr.mxu0 0.0
  %318 = vmatpush1.msra.mxu0 0.0
  %319 = vmatprep.subr.mxu0 0.0
  %320 = vmatpush1.msra.mxu0 0.0
  %321 = vmatprep.subr.mxu0 0.0
  %322 = vmatpush1.msra.mxu0 0.0
  %323 = vmatprep.subr.mxu0 0.0
  %324 = vmatpush1.msra.mxu0 0.0
  %325 = vmatprep.subr.mxu0 0.0
  %326 = vmatpush1.msra.mxu0 0.0
  %327 = vmatprep.subr.mxu0 0.0
  %328 = vmatpush1.msra.mxu0 0.0
  %329 = vmatprep.subr.mxu0 0.0
  %330 = vmatpush1.msra.mxu0 0.0
  %331 = vmatprep.subr.mxu0 0.0
  %332 = vmatpush1.msra.mxu0 0.0
  %333 = vmatprep.subr.mxu0 0.0
  %334 = vmatpush1.msra.mxu0 0.0
  %335 = vmatprep.subr.mxu0 0.0
  %336 = vmatpush1.msra.mxu0 0.0
  %337 = vmatprep.subr.mxu0 0.0
  %338 = vmatpush1.msra.mxu0 0.0
  %339 = vmatprep.subr.mxu0 0.0
  %340 = vmatpush1.msra.mxu0 0.0
  %341 = vmatprep.subr.mxu0 0.0
  %342 = vmatpush1.msra.mxu0 0.0
  %343 = vmatprep.subr.mxu0 0.0
  %344 = vmatpush1.msra.mxu0 0.0
  %345 = vmatprep.subr.mxu0 0.0
  %346 = vmatpush1.msra.mxu0 0.0
  %347 = vmatprep.mubr.f32.mxu0 0.0
  %348 = vmatmul.mubr.f32.gmra.mrb[0].mxu0 %v52
  %v349 = vpop.f32.mrb[0].mxu0
  %v350 = vadd.f32 0.0, %v349
  %v351 = vpop.f32.mrb[0].mxu0
  %352 = vmatprep.mubr.f32.mxu0 0.0
  %353 = vmatmul.mubr.f32.gmra.mrb[0].mxu0 %v55
  %v354 = vpop.f32.mrb[0].mxu0
  %v355 = vadd.f32 0.0, %v354
  %v356 = vpop.f32.mrb[0].mxu0
  %357 = vmatprep.mubr.f32.mxu0 0.0
  %358 = vmatmul.mubr.f32.gmra.mrb[0].mxu0 %v58
  %v359 = vpop.f32.mrb[0].mxu0
  %v360 = vadd.f32 0.0, %v359
  %v361 = vpop.f32.mrb[0].mxu0
  %362 = vmatprep.mubr.f32.mxu0 0.0
  %363 = vmatmul.mubr.f32.gmra.mrb[0].mxu0 %v61
  %v364 = vpop.f32.mrb[0].mxu0
  %v365 = vadd.f32 0.0, %v364
  %v366 = vpop.f32.mrb[0].mxu0
  %367 = vdwg.mxu0
  %v368 = vld [vmem:[%s5] sm:$0xff]
  %v369 = vld [vmem:[%s5 + $0x8] sm:$0xff]
  %v370 = vld [vmem:[%s5 + $0x10] sm:$0xff]
  %v371 = vld [vmem:[%s5 + $0x18] sm:$0xff]
  %v372 = vld [vmem:[%s6] sm:$0x1]
  %v374 = vlaneseq
  %v375 = vshrl.u32 %v374, 7
  %v376 = vsub.s32 0, %v375
  %v377 = vrot.slane %v372, %v376
  %v380 = vsel %vm50, %v350, 0
  %v383 = vsel %vm50, %v355, 0
  %v386 = vsel %vm50, %v360, 0
  %v389 = vsel %vm50, %v365, 0
  %391 = vmatprep.subr.mxu0 0.0
  %392 = vmatpush1.msra.mxu0 %v368
  %393 = vmatprep.subr.mxu0 0.0
  %394 = vmatpush1.msra.mxu0 %v369
  %395 = vmatprep.subr.mxu0 0.0
  %396 = vmatpush1.msra.mxu0 %v370
  %397 = vmatprep.subr.mxu0 0.0
  %398 = vmatpush1.msra.mxu0 %v371
  %399 = vmatprep.subr.mxu0 0.0
  %400 = vmatpush1.msra.mxu0 0.0
  %401 = vmatprep.subr.mxu0 0.0
  %402 = vmatpush1.msra.mxu0 0.0
  %403 = vmatprep.subr.mxu0 0.0
  %404 = vmatpush1.msra.mxu0 0.0
  %405 = vmatprep.subr.mxu0 0.0
  %406 = vmatpush1.msra.mxu0 0.0
  %407 = vmatprep.subr.mxu0 0.0
  %408 = vmatpush1.msra.mxu0 0.0
  %409 = vmatprep.subr.mxu0 0.0
  %410 = vmatpush1.msra.mxu0 0.0
  %411 = vmatprep.subr.mxu0 0.0
  %412 = vmatpush1.msra.mxu0 0.0
  %413 = vmatprep.subr.mxu0 0.0
  %414 = vmatpush1.msra.mxu0 0.0
  %415 = vmatprep.subr.mxu0 0.0
  %416 = vmatpush1.msra.mxu0 0.0
  %417 = vmatprep.subr.mxu0 0.0
  %418 = vmatpush1.msra.mxu0 0.0
  %419 = vmatprep.subr.mxu0 0.0
  %420 = vmatpush1.msra.mxu0 0.0
  %421 = vmatprep.subr.mxu0 0.0
  %422 = vmatpush1.msra.mxu0 0.0
  %423 = vmatprep.subr.mxu0 0.0
  %424 = vmatpush1.msra.mxu0 0.0
  %425 = vmatprep.subr.mxu0 0.0
  %426 = vmatpush1.msra.mxu0 0.0
  %427 = vmatprep.subr.mxu0 0.0
  %428 = vmatpush1.msra.mxu0 0.0
  %429 = vmatprep.subr.mxu0 0.0
  %430 = vmatpush1.msra.mxu0 0.0
  %431 = vmatprep.subr.mxu0 0.0
  %432 = vmatpush1.msra.mxu0 0.0
  %433 = vmatprep.subr.mxu0 0.0
  %434 = vmatpush1.msra.mxu0 0.0
  %435 = vmatprep.subr.mxu0 0.0
  %436 = vmatpush1.msra.mxu0 0.0
  %437 = vmatprep.subr.mxu0 0.0
  %438 = vmatpush1.msra.mxu0 0.0
  %439 = vmatprep.subr.mxu0 0.0
  %440 = vmatpush1.msra.mxu0 0.0
  %441 = vmatprep.subr.mxu0 0.0
  %442 = vmatpush1.msra.mxu0 0.0
  %443 = vmatprep.subr.mxu0 0.0
  %444 = vmatpush1.msra.mxu0 0.0
  %445 = vmatprep.subr.mxu0 0.0
  %446 = vmatpush1.msra.mxu0 0.0
  %447 = vmatprep.subr.mxu0 0.0
  %448 = vmatpush1.msra.mxu0 0.0
  %449 = vmatprep.subr.mxu0 0.0
  %450 = vmatpush1.msra.mxu0 0.0
  %451 = vmatprep.subr.mxu0 0.0
  %452 = vmatpush1.msra.mxu0 0.0
  %453 = vmatprep.subr.mxu0 0.0
  %454 = vmatpush1.msra.mxu0 0.0
  %455 = vmatprep.mubr.f32.mxu0 0.0
  %456 = vmatmul.mubr.f32.gmra.mrb[0].mxu0 %v380
  %v457 = vpop.f32.mrb[0].mxu0
  %v458 = vadd.f32 %v377, %v457
  %v459 = vpop.f32.mrb[0].mxu0
  %460 = vmatprep.mubr.f32.mxu0 0.0
  %461 = vmatmul.mubr.f32.gmra.mrb[0].mxu0 %v383
  %v462 = vpop.f32.mrb[0].mxu0
  %v463 = vadd.f32 %v377, %v462
  %v464 = vpop.f32.mrb[0].mxu0
  %465 = vmatprep.mubr.f32.mxu0 0.0
  %466 = vmatmul.mubr.f32.gmra.mrb[0].mxu0 %v386
  %v467 = vpop.f32.mrb[0].mxu0
  %v468 = vadd.f32 %v377, %v467
  %v469 = vpop.f32.mrb[0].mxu0
  %470 = vmatprep.mubr.f32.mxu0 0.0
  %471 = vmatmul.mubr.f32.gmra.mrb[0].mxu0 %v389
  %v472 = vpop.f32.mrb[0].mxu0
  %v473 = vadd.f32 %v377, %v472
  %v474 = vpop.f32.mrb[0].mxu0
  %475 = vdwg.mxu0
  %v476 = vmul.f32 %v458, %v258
  %v477 = vmul.f32 %v463, %v263
  %v478 = vmul.f32 %v468, %v268
  %v479 = vmul.f32 %v473, %v273
  %v480 = vtanh.pop %v476
  %v481 = vtanh.pop %v477
  %v482 = vtanh.pop %v478
  %v483 = vtanh.pop %v479
  %484 = vmatprep.subr.mxu0 0.0
  %485 = vmatpush1.msra.mxu0 %v480
  %486 = vmatprep.subr.mxu0 0.0
  %487 = vmatpush1.msra.mxu0 %v481
  %488 = vmatprep.subr.mxu0 0.0
  %489 = vmatpush1.msra.mxu0 %v482
  %490 = vmatprep.subr.mxu0 0.0
  %491 = vmatpush1.msra.mxu0 %v483
  %492 = vmatprep.subr.mxu0 0.0
  %493 = vmatpush1.msra.mxu0 0.0
  %494 = vmatprep.subr.mxu0 0.0
  %495 = vmatpush1.msra.mxu0 0.0
  %496 = vmatprep.subr.mxu0 0.0
  %497 = vmatpush1.msra.mxu0 0.0
  %498 = vmatprep.subr.mxu0 0.0
  %499 = vmatpush1.msra.mxu0 0.0
  %500 = vmatprep.subr.mxu0 0.0
  %501 = vmatpush1.msra.mxu0 0.0
  %502 = vmatprep.subr.mxu0 0.0
  %503 = vmatpush1.msra.mxu0 0.0
  %504 = vmatprep.subr.mxu0 0.0
  %505 = vmatpush1.msra.mxu0 0.0
  %506 = vmatprep.subr.mxu0 0.0
  %507 = vmatpush1.msra.mxu0 0.0
  %508 = vmatprep.subr.mxu0 0.0
  %509 = vmatpush1.msra.mxu0 0.0
  %510 = vmatprep.subr.mxu0 0.0
  %511 = vmatpush1.msra.mxu0 0.0
  %512 = vmatprep.subr.mxu0 0.0
  %513 = vmatpush1.msra.mxu0 0.0
  %514 = vmatprep.subr.mxu0 0.0
  %515 = vmatpush1.msra.mxu0 0.0
  %516 = vmatprep.subr.mxu0 0.0
  %517 = vmatpush1.msra.mxu0 0.0
  %518 = vmatprep.subr.mxu0 0.0
  %519 = vmatpush1.msra.mxu0 0.0
  %520 = vmatprep.subr.mxu0 0.0
  %521 = vmatpush1.msra.mxu0 0.0
  %522 = vmatprep.subr.mxu0 0.0
  %523 = vmatpush1.msra.mxu0 0.0
  %524 = vmatprep.subr.mxu0 0.0
  %525 = vmatpush1.msra.mxu0 0.0
  %526 = vmatprep.subr.mxu0 0.0
  %527 = vmatpush1.msra.mxu0 0.0
  %528 = vmatprep.subr.mxu0 0.0
  %529 = vmatpush1.msra.mxu0 0.0
  %530 = vmatprep.subr.mxu0 0.0
  %531 = vmatpush1.msra.mxu0 0.0
  %532 = vmatprep.subr.mxu0 0.0
  %533 = vmatpush1.msra.mxu0 0.0
  %534 = vmatprep.subr.mxu0 0.0
  %535 = vmatpush1.msra.mxu0 0.0
  %536 = vmatprep.subr.mxu0 0.0
  %537 = vmatpush1.msra.mxu0 0.0
  %538 = vmatprep.subr.mxu0 0.0
  %539 = vmatpush1.msra.mxu0 0.0
  %540 = vmatprep.subr.mxu0 0.0
  %541 = vmatpush1.msra.mxu0 0.0
  %542 = vmatprep.subr.mxu0 0.0
  %543 = vmatpush1.msra.mxu0 0.0
  %544 = vmatprep.subr.mxu0 0.0
  %545 = vmatpush1.msra.mxu0 0.0
  %546 = vmatprep.subr.mxu0 0.0
  %547 = vmatpush1.msra.mxu0 0.0
  %548 = vmatprep.mubr.f32.mxu0 0.0
  %549 = vmatmul.mubr.f32.gmra.mrb[0].mxu0 %v52
  %v550 = vpop.f32.mrb[0].mxu0
  %v551 = vadd.f32 0.0, %v550
  %v552 = vpop.f32.mrb[0].mxu0
  %553 = vmatprep.mubr.f32.mxu0 0.0
  %554 = vmatmul.mubr.f32.gmra.mrb[0].mxu0 %v55
  %v555 = vpop.f32.mrb[0].mxu0
  %v556 = vadd.f32 0.0, %v555
  %v557 = vpop.f32.mrb[0].mxu0
  %558 = vmatprep.mubr.f32.mxu0 0.0
  %559 = vmatmul.mubr.f32.gmra.mrb[0].mxu0 %v58
  %v560 = vpop.f32.mrb[0].mxu0
  %v561 = vadd.f32 0.0, %v560
  %v562 = vpop.f32.mrb[0].mxu0
  %563 = vmatprep.mubr.f32.mxu0 0.0
  %564 = vmatmul.mubr.f32.gmra.mrb[0].mxu0 %v61
  %v565 = vpop.f32.mrb[0].mxu0
  %v566 = vadd.f32 0.0, %v565
  %v567 = vpop.f32.mrb[0].mxu0
  %568 = vdwg.mxu0
  %v569 = vld [vmem:[%s7] sm:$0xff]
  %v570 = vld [vmem:[%s7 + $0x8] sm:$0xff]
  %v571 = vld [vmem:[%s7 + $0x10] sm:$0xff]
  %v572 = vld [vmem:[%s7 + $0x18] sm:$0xff]
  %v573 = vld [vmem:[%s8] sm:$0x1]
  %v575 = vlaneseq
  %v576 = vshrl.u32 %v575, 7
  %v577 = vsub.s32 0, %v576
  %v578 = vrot.slane %v573, %v577
  %v581 = vsel %vm50, %v551, 0
  %v584 = vsel %vm50, %v556, 0
  %v587 = vsel %vm50, %v561, 0
  %v590 = vsel %vm50, %v566, 0
  %592 = vmatprep.subr.mxu0 0.0
  %593 = vmatpush1.msra.mxu0 %v569
  %594 = vmatprep.subr.mxu0 0.0
  %595 = vmatpush1.msra.mxu0 %v570
  %596 = vmatprep.subr.mxu0 0.0
  %597 = vmatpush1.msra.mxu0 %v571
  %598 = vmatprep.subr.mxu0 0.0
  %599 = vmatpush1.msra.mxu0 %v572
  %600 = vmatprep.subr.mxu0 0.0
  %601 = vmatpush1.msra.mxu0 0.0
  %602 = vmatprep.subr.mxu0 0.0
  %603 = vmatpush1.msra.mxu0 0.0
  %604 = vmatprep.subr.mxu0 0.0
  %605 = vmatpush1.msra.mxu0 0.0
  %606 = vmatprep.subr.mxu0 0.0
  %607 = vmatpush1.msra.mxu0 0.0
  %608 = vmatprep.subr.mxu0 0.0
  %609 = vmatpush1.msra.mxu0 0.0
  %610 = vmatprep.subr.mxu0 0.0
  %611 = vmatpush1.msra.mxu0 0.0
  %612 = vmatprep.subr.mxu0 0.0
  %613 = vmatpush1.msra.mxu0 0.0
  %614 = vmatprep.subr.mxu0 0.0
  %615 = vmatpush1.msra.mxu0 0.0
  %616 = vmatprep.subr.mxu0 0.0
  %617 = vmatpush1.msra.mxu0 0.0
  %618 = vmatprep.subr.mxu0 0.0
  %619 = vmatpush1.msra.mxu0 0.0
  %620 = vmatprep.subr.mxu0 0.0
  %621 = vmatpush1.msra.mxu0 0.0
  %622 = vmatprep.subr.mxu0 0.0
  %623 = vmatpush1.msra.mxu0 0.0
  %624 = vmatprep.subr.mxu0 0.0
  %625 = vmatpush1.msra.mxu0 0.0
  %626 = vmatprep.subr.mxu0 0.0
  %627 = vmatpush1.msra.mxu0 0.0
  %628 = vmatprep.subr.mxu0 0.0
  %629 = vmatpush1.msra.mxu0 0.0
  %630 = vmatprep.subr.mxu0 0.0
  %631 = vmatpush1.msra.mxu0 0.0
  %632 = vmatprep.subr.mxu0 0.0
  %633 = vmatpush1.msra.mxu0 0.0
  %634 = vmatprep.subr.mxu0 0.0
  %635 = vmatpush1.msra.mxu0 0.0
  %636 = vmatprep.subr.mxu0 0.0
  %637 = vmatpush1.msra.mxu0 0.0
  %638 = vmatprep.subr.mxu0 0.0
  %639 = vmatpush1.msra.mxu0 0.0
  %640 = vmatprep.subr.mxu0 0.0
  %641 = vmatpush1.msra.mxu0 0.0
  %642 = vmatprep.subr.mxu0 0.0
  %643 = vmatpush1.msra.mxu0 0.0
  %644 = vmatprep.subr.mxu0 0.0
  %645 = vmatpush1.msra.mxu0 0.0
  %646 = vmatprep.subr.mxu0 0.0
  %647 = vmatpush1.msra.mxu0 0.0
  %648 = vmatprep.subr.mxu0 0.0
  %649 = vmatpush1.msra.mxu0 0.0
  %650 = vmatprep.subr.mxu0 0.0
  %651 = vmatpush1.msra.mxu0 0.0
  %652 = vmatprep.subr.mxu0 0.0
  %653 = vmatpush1.msra.mxu0 0.0
  %654 = vmatprep.subr.mxu0 0.0
  %655 = vmatpush1.msra.mxu0 0.0
  %656 = vmatprep.mubr.f32.mxu0 0.0
  %657 = vmatmul.mubr.f32.gmra.mrb[0].mxu0 %v581
  %v658 = vpop.f32.mrb[0].mxu0
  %v659 = vadd.f32 %v578, %v658
  %v660 = vpop.f32.mrb[0].mxu0
  %661 = vmatprep.mubr.f32.mxu0 0.0
  %662 = vmatmul.mubr.f32.gmra.mrb[0].mxu0 %v584
  %v663 = vpop.f32.mrb[0].mxu0
  %v664 = vadd.f32 %v578, %v663
  %v665 = vpop.f32.mrb[0].mxu0
  %666 = vmatprep.mubr.f32.mxu0 0.0
  %667 = vmatmul.mubr.f32.gmra.mrb[0].mxu0 %v587
  %v668 = vpop.f32.mrb[0].mxu0
  %v669 = vadd.f32 %v578, %v668
  %v670 = vpop.f32.mrb[0].mxu0
  %671 = vmatprep.mubr.f32.mxu0 0.0
  %672 = vmatmul.mubr.f32.gmra.mrb[0].mxu0 %v590
  %v673 = vpop.f32.mrb[0].mxu0
  %v674 = vadd.f32 %v578, %v673
  %v675 = vpop.f32.mrb[0].mxu0
  %676 = vdwg.mxu0
  %v677 = vmul.f32 %v659, %v258
  %v678 = vmul.f32 %v664, %v263
  %v679 = vmul.f32 %v669, %v268
  %v680 = vmul.f32 %v674, %v273
  %v681 = vtanh.pop %v677
  %v682 = vtanh.pop %v678
  %v683 = vtanh.pop %v679
  %v684 = vtanh.pop %v680
  %685 = vmatprep.subr.mxu0 0.0
  %686 = vmatpush1.msra.mxu0 %v681
  %687 = vmatprep.subr.mxu0 0.0
  %688 = vmatpush1.msra.mxu0 %v682
  %689 = vmatprep.subr.mxu0 0.0
  %690 = vmatpush1.msra.mxu0 %v683
  %691 = vmatprep.subr.mxu0 0.0
  %692 = vmatpush1.msra.mxu0 %v684
  %693 = vmatprep.subr.mxu0 0.0
  %694 = vmatpush1.msra.mxu0 0.0
  %695 = vmatprep.subr.mxu0 0.0
  %696 = vmatpush1.msra.mxu0 0.0
  %697 = vmatprep.subr.mxu0 0.0
  %698 = vmatpush1.msra.mxu0 0.0
  %699 = vmatprep.subr.mxu0 0.0
  %700 = vmatpush1.msra.mxu0 0.0
  %701 = vmatprep.subr.mxu0 0.0
  %702 = vmatpush1.msra.mxu0 0.0
  %703 = vmatprep.subr.mxu0 0.0
  %704 = vmatpush1.msra.mxu0 0.0
  %705 = vmatprep.subr.mxu0 0.0
  %706 = vmatpush1.msra.mxu0 0.0
  %707 = vmatprep.subr.mxu0 0.0
  %708 = vmatpush1.msra.mxu0 0.0
  %709 = vmatprep.subr.mxu0 0.0
  %710 = vmatpush1.msra.mxu0 0.0
  %711 = vmatprep.subr.mxu0 0.0
  %712 = vmatpush1.msra.mxu0 0.0
  %713 = vmatprep.subr.mxu0 0.0
  %714 = vmatpush1.msra.mxu0 0.0
  %715 = vmatprep.subr.mxu0 0.0
  %716 = vmatpush1.msra.mxu0 0.0
  %717 = vmatprep.subr.mxu0 0.0
  %718 = vmatpush1.msra.mxu0 0.0
  %719 = vmatprep.subr.mxu0 0.0
  %720 = vmatpush1.msra.mxu0 0.0
  %721 = vmatprep.subr.mxu0 0.0
  %722 = vmatpush1.msra.mxu0 0.0
  %723 = vmatprep.subr.mxu0 0.0
  %724 = vmatpush1.msra.mxu0 0.0
  %725 = vmatprep.subr.mxu0 0.0
  %726 = vmatpush1.msra.mxu0 0.0
  %727 = vmatprep.subr.mxu0 0.0
  %728 = vmatpush1.msra.mxu0 0.0
  %729 = vmatprep.subr.mxu0 0.0
  %730 = vmatpush1.msra.mxu0 0.0
  %731 = vmatprep.subr.mxu0 0.0
  %732 = vmatpush1.msra.mxu0 0.0
  %733 = vmatprep.subr.mxu0 0.0
  %734 = vmatpush1.msra.mxu0 0.0
  %735 = vmatprep.subr.mxu0 0.0
  %736 = vmatpush1.msra.mxu0 0.0
  %737 = vmatprep.subr.mxu0 0.0
  %738 = vmatpush1.msra.mxu0 0.0
  %739 = vmatprep.subr.mxu0 0.0
  %740 = vmatpush1.msra.mxu0 0.0
  %741 = vmatprep.subr.mxu0 0.0
  %742 = vmatpush1.msra.mxu0 0.0
  %743 = vmatprep.subr.mxu0 0.0
  %744 = vmatpush1.msra.mxu0 0.0
  %745 = vmatprep.subr.mxu0 0.0
  %746 = vmatpush1.msra.mxu0 0.0
  %747 = vmatprep.subr.mxu0 0.0
  %748 = vmatpush1.msra.mxu0 0.0
  %749 = vmatprep.mubr.f32.mxu0 0.0
  %750 = vmatmul.mubr.f32.gmra.mrb[0].mxu0 %v52
  %v751 = vpop.f32.mrb[0].mxu0
  %v752 = vadd.f32 0.0, %v751
  %v753 = vpop.f32.mrb[0].mxu0
  %754 = vmatprep.mubr.f32.mxu0 0.0
  %755 = vmatmul.mubr.f32.gmra.mrb[0].mxu0 %v55
  %v756 = vpop.f32.mrb[0].mxu0
  %v757 = vadd.f32 0.0, %v756
  %v758 = vpop.f32.mrb[0].mxu0
  %759 = vmatprep.mubr.f32.mxu0 0.0
  %760 = vmatmul.mubr.f32.gmra.mrb[0].mxu0 %v58
  %v761 = vpop.f32.mrb[0].mxu0
  %v762 = vadd.f32 0.0, %v761
  %v763 = vpop.f32.mrb[0].mxu0
  %764 = vmatprep.mubr.f32.mxu0 0.0
  %765 = vmatmul.mubr.f32.gmra.mrb[0].mxu0 %v61
  %v766 = vpop.f32.mrb[0].mxu0
  %v767 = vadd.f32 0.0, %v766
  %v768 = vpop.f32.mrb[0].mxu0
  %769 = vdwg.mxu0
  %v770 = vld [vmem:[%s9] sm:$0xff]
  %v771 = vld [vmem:[%s9 + $0x8] sm:$0xff]
  %v772 = vld [vmem:[%s9 + $0x10] sm:$0xff]
  %v773 = vld [vmem:[%s9 + $0x18] sm:$0xff]
  %v774 = vld [vmem:[%s10] sm:$0x1]
  %v776 = vlaneseq
  %v777 = vshrl.u32 %v776, 7
  %v778 = vsub.s32 0, %v777
  %v779 = vrot.slane %v774, %v778
  %v782 = vsel %vm50, %v752, 0
  %v785 = vsel %vm50, %v757, 0
  %v788 = vsel %vm50, %v762, 0
  %v791 = vsel %vm50, %v767, 0
  %793 = vmatprep.subr.mxu0 0.0
  %794 = vmatpush1.msra.mxu0 %v770
  %795 = vmatprep.subr.mxu0 0.0
  %796 = vmatpush1.msra.mxu0 %v771
  %797 = vmatprep.subr.mxu0 0.0
  %798 = vmatpush1.msra.mxu0 %v772
  %799 = vmatprep.subr.mxu0 0.0
  %800 = vmatpush1.msra.mxu0 %v773
  %801 = vmatprep.subr.mxu0 0.0
  %802 = vmatpush1.msra.mxu0 0.0
  %803 = vmatprep.subr.mxu0 0.0
  %804 = vmatpush1.msra.mxu0 0.0
  %805 = vmatprep.subr.mxu0 0.0
  %806 = vmatpush1.msra.mxu0 0.0
  %807 = vmatprep.subr.mxu0 0.0
  %808 = vmatpush1.msra.mxu0 0.0
  %809 = vmatprep.subr.mxu0 0.0
  %810 = vmatpush1.msra.mxu0 0.0
  %811 = vmatprep.subr.mxu0 0.0
  %812 = vmatpush1.msra.mxu0 0.0
  %813 = vmatprep.subr.mxu0 0.0
  %814 = vmatpush1.msra.mxu0 0.0
  %815 = vmatprep.subr.mxu0 0.0
  %816 = vmatpush1.msra.mxu0 0.0
  %817 = vmatprep.subr.mxu0 0.0
  %818 = vmatpush1.msra.mxu0 0.0
  %819 = vmatprep.subr.mxu0 0.0
  %820 = vmatpush1.msra.mxu0 0.0
  %821 = vmatprep.subr.mxu0 0.0
  %822 = vmatpush1.msra.mxu0 0.0
  %823 = vmatprep.subr.mxu0 0.0
  %824 = vmatpush1.msra.mxu0 0.0
  %825 = vmatprep.subr.mxu0 0.0
  %826 = vmatpush1.msra.mxu0 0.0
  %827 = vmatprep.subr.mxu0 0.0
  %828 = vmatpush1.msra.mxu0 0.0
  %829 = vmatprep.subr.mxu0 0.0
  %830 = vmatpush1.msra.mxu0 0.0
  %831 = vmatprep.subr.mxu0 0.0
  %832 = vmatpush1.msra.mxu0 0.0
  %833 = vmatprep.subr.mxu0 0.0
  %834 = vmatpush1.msra.mxu0 0.0
  %835 = vmatprep.subr.mxu0 0.0
  %836 = vmatpush1.msra.mxu0 0.0
  %837 = vmatprep.subr.mxu0 0.0
  %838 = vmatpush1.msra.mxu0 0.0
  %839 = vmatprep.subr.mxu0 0.0
  %840 = vmatpush1.msra.mxu0 0.0
  %841 = vmatprep.subr.mxu0 0.0
  %842 = vmatpush1.msra.mxu0 0.0
  %843 = vmatprep.subr.mxu0 0.0
  %844 = vmatpush1.msra.mxu0 0.0
  %845 = vmatprep.subr.mxu0 0.0
  %846 = vmatpush1.msra.mxu0 0.0
  %847 = vmatprep.subr.mxu0 0.0
  %848 = vmatpush1.msra.mxu0 0.0
  %849 = vmatprep.subr.mxu0 0.0
  %850 = vmatpush1.msra.mxu0 0.0
  %851 = vmatprep.subr.mxu0 0.0
  %852 = vmatpush1.msra.mxu0 0.0
  %853 = vmatprep.subr.mxu0 0.0
  %854 = vmatpush1.msra.mxu0 0.0
  %855 = vmatprep.subr.mxu0 0.0
  %856 = vmatpush1.msra.mxu0 0.0
  %857 = vmatprep.mubr.f32.mxu0 0.0
  %858 = vmatmul.mubr.f32.gmra.mrb[0].mxu0 %v782
  %v859 = vpop.f32.mrb[0].mxu0
  %v860 = vadd.f32 %v779, %v859
  %v861 = vpop.f32.mrb[0].mxu0
  %862 = vmatprep.mubr.f32.mxu0 0.0
  %863 = vmatmul.mubr.f32.gmra.mrb[0].mxu0 %v785
  %v864 = vpop.f32.mrb[0].mxu0
  %v865 = vadd.f32 %v779, %v864
  %v866 = vpop.f32.mrb[0].mxu0
  %867 = vmatprep.mubr.f32.mxu0 0.0
  %868 = vmatmul.mubr.f32.gmra.mrb[0].mxu0 %v788
  %v869 = vpop.f32.mrb[0].mxu0
  %v870 = vadd.f32 %v779, %v869
  %v871 = vpop.f32.mrb[0].mxu0
  %872 = vmatprep.mubr.f32.mxu0 0.0
  %873 = vmatmul.mubr.f32.gmra.mrb[0].mxu0 %v791
  %v874 = vpop.f32.mrb[0].mxu0
  %v875 = vadd.f32 %v779, %v874
  %v876 = vpop.f32.mrb[0].mxu0
  %877 = vdwg.mxu0
  %v878 = vmul.f32 %v860, %v258
  %v879 = vmul.f32 %v865, %v263
  %v880 = vmul.f32 %v870, %v268
  %v881 = vmul.f32 %v875, %v273
  %v882 = vtanh.pop %v878
  %v883 = vtanh.pop %v879
  %v884 = vtanh.pop %v880
  %v885 = vtanh.pop %v881
  %890 = vrot.lane.b32.xlu0 %v480, 32
  %v891 = vpop.permute.xlu0 %890
  %892 = vrot.lane.b32.xlu0 %v481, 32
  %v893 = vpop.permute.xlu0 %892
  %894 = vrot.lane.b32.xlu0 %v482, 32
  %v895 = vpop.permute.xlu0 %894
  %896 = vrot.lane.b32.xlu0 %v483, 32
  %v897 = vpop.permute.xlu0 %896
  %906 = vrot.lane.b32.xlu0 %v681, 64
  %v907 = vpop.permute.xlu0 %906
  %908 = vrot.lane.b32.xlu0 %v682, 64
  %v909 = vpop.permute.xlu0 %908
  %910 = vrot.lane.b32.xlu0 %v683, 64
  %v911 = vpop.permute.xlu0 %910
  %912 = vrot.lane.b32.xlu0 %v684, 64
  %v913 = vpop.permute.xlu0 %912
  %922 = vrot.lane.b32.xlu0 %v882, 96
  %v923 = vpop.permute.xlu0 %922
  %924 = vrot.lane.b32.xlu0 %v883, 96
  %v925 = vpop.permute.xlu0 %924
  %926 = vrot.lane.b32.xlu0 %v884, 96
  %v927 = vpop.permute.xlu0 %926
  %928 = vrot.lane.b32.xlu0 %v885, 96
  %v929 = vpop.permute.xlu0 %928
  %v934 = vsel %vm50, %v279, %v891
  %v935 = vsel %vm50, %v280, %v893
  %v936 = vsel %vm50, %v281, %v895
  %v937 = vsel %vm50, %v282, %v897
  %vm938 = vcmask 523264
  %v939 = vsel %vm938, %v934, %v907
  %v940 = vsel %vm938, %v935, %v909
  %v941 = vsel %vm938, %v936, %v911
  %v942 = vsel %vm938, %v937, %v913
  %vm943 = vcmask 785408
  %v944 = vsel %vm943, %v939, %v923
  %v945 = vsel %vm943, %v940, %v925
  %v946 = vsel %vm943, %v941, %v927
  %v947 = vsel %vm943, %v942, %v929
  %948 = vst [vmem:[%s11] sm:$0xff] %v944
  %949 = vst [vmem:[%s11 + $0x8] sm:$0xff] %v945
  %950 = vst [vmem:[%s11 + $0x10] sm:$0xff] %v946
  %951 = vst [vmem:[%s11 + $0x18] sm:$0xff] %v947
  // Predicated region
  $region46: #{classifier_forward.2} parent=0 // pred_check
    _
  $region47: #{classifier_forward.2} parent=0 // pred_check_branch
    %953 = sbr.rel (0) target = $region49
  $region48: #{classifier_forward.2} parent=0 // pred_region
    _
  $region49: #{classifier_forward.2} parent=0 // pred_fallthru
    _
  // Predicated region
  $region50: #{classifier_forward.2} parent=0 // pred_check
    _
  $region51: #{classifier_forward.2} parent=0 // pred_check_branch
    %955 = sbr.rel (0) target = $region53
  $region52: #{classifier_forward.2} parent=0 // pred_region
    _
  $region53: #{classifier_forward.2} parent=0 // pred_fallthru
    _

// kernel: classifier_forward.3
$region0: #{classifier_forward.3}
  #allocation0 [shape = 'u32[]', space=smem, size = 0x4, offset = 0x4, fixed_abs, tag = 'smem constant byte address 0x4 - core index']
  #allocation1 [shape = 'u32[144,128]{1,0:T(1,128)}', space=vmem, size = 0x12000, scoped, tag = 'internal scratch']
  #allocation2 [shape = 'f32[32,16]{1,0:T(8,128)}', space=vmem, size = 0x4000, scoped, tag = 'scratch operand']
  #allocation3 [shape = 'f32[16,16]{1,0:T(8,128)}', space=vmem, size = 0x2000, scoped, tag = 'scratch operand']
  #allocation4 [shape = 'f32[8,32]{1,0:T(8,128)}', space=vmem, size = 0x1000, scoped, tag = 'scratch operand']
  %s0 = inlined_call_operand.vmem [shape: f32[32,128], index: 0, kind: input, shape index: {}]
  %s1 = inlined_call_operand.vmem [shape: f32[128,16], index: 1, kind: input, shape index: {}]
  %s2 = inlined_call_operand.vmem [shape: f32[1,16], index: 2, kind: input, shape index: {}]
  %s3 = inlined_call_operand.vmem [shape: f32[80,32], index: 3, kind: input, shape index: {}]
  %s4 = inlined_call_operand.vmem [shape: f32[1,32], index: 4, kind: input, shape index: {}]
  %s5 = inlined_call_operand.vmem [shape: f32[128,32], index: 5, kind: input, shape index: {}]
  %s6 = inlined_call_operand.vmem [shape: f32[1,32], index: 6, kind: input, shape index: {}]
  %s7 = inlined_call_operand.vmem [shape: f32[32,2], index: 7, kind: input, shape index: {}]
  %s8 = inlined_call_operand.vmem [shape: f32[1,2], index: 8, kind: input, shape index: {}]
  %s9 = inlined_call_operand.vmem [shape: f32[2,2], index: 9, kind: output, shape index: {}]
  %s10 = sld [smem:[#allocation0]]
  $region46: #{classifier_forward.3} parent=0
    _
  %s12 = ssub.s32 1, %s10
  %s13 = scalar_select 0, %s12, %s10
  // Predicated region
  $region2: #{classifier_forward.3} parent=0 // pred_check
    _
  $region3: #{classifier_forward.3} parent=0 // pred_check_branch
    %15 = sbr.rel (0) target = $region5
  $region4: #{classifier_forward.3} parent=0 // pred_region
    _
  $region5: #{classifier_forward.3} parent=0 // pred_fallthru
    _
  // Predicated region
  $region6: #{classifier_forward.3} parent=0 // pred_check
    _
  $region7: #{classifier_forward.3} parent=0 // pred_check_branch
    %17 = sbr.rel (0) target = $region9
  $region8: #{classifier_forward.3} parent=0 // pred_region
    _
  $region9: #{classifier_forward.3} parent=0 // pred_fallthru
    _
  // Predicated region
  $region10: #{classifier_forward.3} parent=0 // pred_check
    _
  $region11: #{classifier_forward.3} parent=0 // pred_check_branch
    %19 = sbr.rel (0) target = $region13
  $region12: #{classifier_forward.3} parent=0 // pred_region
    _
  $region13: #{classifier_forward.3} parent=0 // pred_fallthru
    _
  // Predicated region
  $region14: #{classifier_forward.3} parent=0 // pred_check
    _
  $region15: #{classifier_forward.3} parent=0 // pred_check_branch
    %21 = sbr.rel (0) target = $region17
  $region16: #{classifier_forward.3} parent=0 // pred_region
    _
  $region17: #{classifier_forward.3} parent=0 // pred_fallthru
    _
  // Predicated region
  $region18: #{classifier_forward.3} parent=0 // pred_check
    _
  $region19: #{classifier_forward.3} parent=0 // pred_check_branch
    %23 = sbr.rel (0) target = $region21
  $region20: #{classifier_forward.3} parent=0 // pred_region
    _
  $region21: #{classifier_forward.3} parent=0 // pred_fallthru
    _
  // Predicated region
  $region22: #{classifier_forward.3} parent=0 // pred_check
    _
  $region23: #{classifier_forward.3} parent=0 // pred_check_branch
    %25 = sbr.rel (0) target = $region25
  $region24: #{classifier_forward.3} parent=0 // pred_region
    _
  $region25: #{classifier_forward.3} parent=0 // pred_fallthru
    _
  // Predicated region
  $region26: #{classifier_forward.3} parent=0 // pred_check
    _
  $region27: #{classifier_forward.3} parent=0 // pred_check_branch
    %27 = sbr.rel (0) target = $region29
  $region28: #{classifier_forward.3} parent=0 // pred_region
    _
  $region29: #{classifier_forward.3} parent=0 // pred_fallthru
    _
  // Predicated region
  $region30: #{classifier_forward.3} parent=0 // pred_check
    _
  $region31: #{classifier_forward.3} parent=0 // pred_check_branch
    %29 = sbr.rel (0) target = $region33
  $region32: #{classifier_forward.3} parent=0 // pred_region
    _
  $region33: #{classifier_forward.3} parent=0 // pred_fallthru
    _
  // Predicated region
  $region34: #{classifier_forward.3} parent=0 // pred_check
    _
  $region35: #{classifier_forward.3} parent=0 // pred_check_branch
    %31 = sbr.rel (0) target = $region37
  $region36: #{classifier_forward.3} parent=0 // pred_region
    _
  $region37: #{classifier_forward.3} parent=0 // pred_fallthru
    _
  %v32 = vld [vmem:[%s0] sm:$0xff]
  %v33 = vld [vmem:[%s0 + $0x8] sm:$0xff]
  %v34 = vld [vmem:[%s0 + $0x10] sm:$0xff]
  %v35 = vld [vmem:[%s0 + $0x18] sm:$0xff]
  %v36 = vld [vmem:[%s1] sm:$0xff]
  %v37 = vld [vmem:[%s1 + $0x8] sm:$0xff]
  %v38 = vld [vmem:[%s1 + $0x10] sm:$0xff]
  %v39 = vld [vmem:[%s1 + $0x18] sm:$0xff]
  %v40 = vld [vmem:[%s1 + $0x20] sm:$0xff]
  %v41 = vld [vmem:[%s1 + $0x28] sm:$0xff]
  %v42 = vld [vmem:[%s1 + $0x30] sm:$0xff]
  %v43 = vld [vmem:[%s1 + $0x38] sm:$0xff]
  %v44 = vld [vmem:[%s1 + $0x40] sm:$0xff]
  %v45 = vld [vmem:[%s1 + $0x48] sm:$0xff]
  %v46 = vld [vmem:[%s1 + $0x50] sm:$0xff]
  %v47 = vld [vmem:[%s1 + $0x58] sm:$0xff]
  %v48 = vld [vmem:[%s1 + $0x60] sm:$0xff]
  %v49 = vld [vmem:[%s1 + $0x68] sm:$0xff]
  %v50 = vld [vmem:[%s1 + $0x70] sm:$0xff]
  %v51 = vld [vmem:[%s1 + $0x78] sm:$0xff]
  %v52 = vld [vmem:[%s2] sm:$0x1]
  %v54 = vlaneseq
  %v55 = vshrl.u32 %v54, 7
  %v56 = vsub.s32 0, %v55
  %v57 = vrot.slane %v52, %v56
  %59 = vmatprep.subr.mxu0 0.0
  %60 = vmatpush1.msra.mxu0 %v36
  %61 = vmatprep.subr.mxu0 0.0
  %62 = vmatpush1.msra.mxu0 %v37
  %63 = vmatprep.subr.mxu0 0.0
  %64 = vmatpush1.msra.mxu0 %v38
  %65 = vmatprep.subr.mxu0 0.0
  %66 = vmatpush1.msra.mxu0 %v39
  %67 = vmatprep.subr.mxu0 0.0
  %68 = vmatpush1.msra.mxu0 %v40
  %69 = vmatprep.subr.mxu0 0.0
  %70 = vmatpush1.msra.mxu0 %v41
  %71 = vmatprep.subr.mxu0 0.0
  %72 = vmatpush1.msra.mxu0 %v42
  %73 = vmatprep.subr.mxu0 0.0
  %74 = vmatpush1.msra.mxu0 %v43
  %75 = vmatprep.subr.mxu0 0.0
  %76 = vmatpush1.msra.mxu0 %v44
  %77 = vmatprep.subr.mxu0 0.0
  %78 = vmatpush1.msra.mxu0 %v45
  %79 = vmatprep.subr.mxu0 0.0
  %80 = vmatpush1.msra.mxu0 %v46
  %81 = vmatprep.subr.mxu0 0.0
  %82 = vmatpush1.msra.mxu0 %v47
  %83 = vmatprep.subr.mxu0 0.0
  %84 = vmatpush1.msra.mxu0 %v48
  %85 = vmatprep.subr.mxu0 0.0
  %86 = vmatpush1.msra.mxu0 %v49
  %87 = vmatprep.subr.mxu0 0.0
  %88 = vmatpush1.msra.mxu0 %v50
  %89 = vmatprep.subr.mxu0 0.0
  %90 = vmatpush1.msra.mxu0 %v51
  %91 = vmatprep.subr.mxu0 0.0
  %92 = vmatpush1.msra.mxu0 0.0
  %93 = vmatprep.subr.mxu0 0.0
  %94 = vmatpush1.msra.mxu0 0.0
  %95 = vmatprep.subr.mxu0 0.0
  %96 = vmatpush1.msra.mxu0 0.0
  %97 = vmatprep.subr.mxu0 0.0
  %98 = vmatpush1.msra.mxu0 0.0
  %99 = vmatprep.subr.mxu0 0.0
  %100 = vmatpush1.msra.mxu0 0.0
  %101 = vmatprep.subr.mxu0 0.0
  %102 = vmatpush1.msra.mxu0 0.0
  %103 = vmatprep.subr.mxu0 0.0
  %104 = vmatpush1.msra.mxu0 0.0
  %105 = vmatprep.subr.mxu0 0.0
  %106 = vmatpush1.msra.mxu0 0.0
  %107 = vmatprep.subr.mxu0 0.0
  %108 = vmatpush1.msra.mxu0 0.0
  %109 = vmatprep.subr.mxu0 0.0
  %110 = vmatpush1.msra.mxu0 0.0
  %111 = vmatprep.subr.mxu0 0.0
  %112 = vmatpush1.msra.mxu0 0.0
  %113 = vmatprep.subr.mxu0 0.0
  %114 = vmatpush1.msra.mxu0 0.0
  %115 = vmatprep.subr.mxu0 0.0
  %116 = vmatpush1.msra.mxu0 0.0
  %117 = vmatprep.subr.mxu0 0.0
  %118 = vmatpush1.msra.mxu0 0.0
  %119 = vmatprep.subr.mxu0 0.0
  %120 = vmatpush1.msra.mxu0 0.0
  %121 = vmatprep.subr.mxu0 0.0
  %122 = vmatpush1.msra.mxu0 0.0
  %123 = vmatprep.mubr.f32.mxu0 0.0
  %124 = vmatmul.mubr.f32.gmra.mrb[0].mxu0 %v32
  %v125 = vpop.f32.mrb[0].mxu0
  %v126 = vadd.f32 %v57, %v125
  %v127 = vpop.f32.mrb[0].mxu0
  %128 = vmatprep.mubr.f32.mxu0 0.0
  %129 = vmatmul.mubr.f32.gmra.mrb[0].mxu0 %v33
  %v130 = vpop.f32.mrb[0].mxu0
  %v131 = vadd.f32 %v57, %v130
  %v132 = vpop.f32.mrb[0].mxu0
  %133 = vmatprep.mubr.f32.mxu0 0.0
  %134 = vmatmul.mubr.f32.gmra.mrb[0].mxu0 %v34
  %v135 = vpop.f32.mrb[0].mxu0
  %v136 = vadd.f32 %v57, %v135
  %v137 = vpop.f32.mrb[0].mxu0
  %138 = vmatprep.mubr.f32.mxu0 0.0
  %139 = vmatmul.mubr.f32.gmra.mrb[0].mxu0 %v35
  %v140 = vpop.f32.mrb[0].mxu0
  %v141 = vadd.f32 %v57, %v140
  %v142 = vpop.f32.mrb[0].mxu0
  %143 = vdwg.mxu0
  %v144 = vmax.f32 %v126, 0.0
  %v145 = vmax.f32 %v131, 0.0
  %v146 = vmax.f32 %v136, 0.0
  %v147 = vmax.f32 %v141, 0.0
  %vm148 = vcmask 130048
  %149 = vst.msk [vmem:[#allocation2] sm:$0xff] %vm148, %v144
  %150 = vst.msk [vmem:[#allocation2 + $0x8] sm:$0xff] %vm148, %v145
  %151 = vst.msk [vmem:[#allocation2 + $0x10] sm:$0xff] %vm148, %v146
  %152 = vst.msk [vmem:[#allocation2 + $0x18] sm:$0xff] %vm148, %v147
  %v153 = vld [vmem:[#allocation2] ss:$2 sm:$0xff]
  %s154 = scalar_lea.vmem [#allocation2], 16
  %v155 = vld [vmem:[%s154] ss:$2 sm:$0xff]
  %s156 = scalar_lea.vmem [#allocation2], 1
  %v157 = vld [vmem:[%s156] ss:$2 sm:$0xff]
  %s158 = scalar_lea.vmem [#allocation2], 17
  %v159 = vld [vmem:[%s158] ss:$2 sm:$0xff]
  %v160 = vmax.f32 %v153, %v157
  %v161 = vmax.f32 %v155, %v159
  %162 = vst.msk [vmem:[#allocation3] sm:$0xff] %vm148, %v160
  %163 = vst.msk [vmem:[#allocation3 + $0x8] sm:$0xff] %vm148, %v161
  %v164 = vld [vmem:[#allocation3] sm:$0xf]
  %v165 = vld [vmem:[#allocation3 + $0x1] sm:$0xf]
  %v166 = vld [vmem:[#allocation3 + $0x2] sm:$0xf]
  %v167 = vld [vmem:[#allocation3 + $0x3] sm:$0xf]
  %v168 = vld [vmem:[#allocation3 + $0x4] sm:$0xf]
  %170 = vrot.lane.b32.xlu0 %v165, 16
  %v171 = vpop.permute.xlu0 %170
  %174 = vrot.lane.b32.xlu0 %v166, 32
  %v175 = vpop.permute.xlu0 %174
  %178 = vrot.lane.b32.xlu0 %v167, 48
  %v179 = vpop.permute.xlu0 %178
  %182 = vrot.lane.b32.xlu0 %v168, 64
  %v183 = vpop.permute.xlu0 %182
  %v185 = vsel %vm148, %v164, %v171
  %vm186 = vcmask 261120
  %v187 = vsel %vm186, %v185, %v175
  %vm188 = vcmask 392192
  %v189 = vsel %vm188, %v187, %v179
  %vm190 = vcmask 523264
  %v191 = vsel %vm190, %v189, %v183
  %v192 = vld [vmem:[#allocation3 + $0x8] sm:$0xf]
  %v193 = vld [vmem:[#allocation3 + $0x9] sm:$0xf]
  %v194 = vld [vmem:[#allocation3 + $0xa] sm:$0xf]
  %v195 = vld [vmem:[#allocation3 + $0xb] sm:$0xf]
  %v196 = vld [vmem:[#allocation3 + $0xc] sm:$0xf]
  %198 = vrot.lane.b32.xlu0 %v193, 16
  %v199 = vpop.permute.xlu0 %198
  %202 = vrot.lane.b32.xlu0 %v194, 32
  %v203 = vpop.permute.xlu0 %202
  %206 = vrot.lane.b32.xlu0 %v195, 48
  %v207 = vpop.permute.xlu0 %206
  %210 = vrot.lane.b32.xlu0 %v196, 64
  %v211 = vpop.permute.xlu0 %210
  %v213 = vsel %vm148, %v192, %v199
  %v214 = vsel %vm186, %v213, %v203
  %v215 = vsel %vm188, %v214, %v207
  %v216 = vsel %vm190, %v215, %v211
  %v218 = vrot.slane %v216, 4
  %vm220 = vcmask 1043456
  %v221 = vsel %vm220, %v191, %v218
  %v222 = vld [vmem:[%s3] sm:$0xff]
  %v223 = vld [vmem:[%s3 + $0x8] sm:$0xff]
  %v224 = vld [vmem:[%s3 + $0x10] sm:$0xff]
  %v225 = vld [vmem:[%s3 + $0x18] sm:$0xff]
  %v226 = vld [vmem:[%s3 + $0x20] sm:$0xff]
  %v227 = vld [vmem:[%s3 + $0x28] sm:$0xff]
  %v228 = vld [vmem:[%s3 + $0x30] sm:$0xff]
  %v229 = vld [vmem:[%s3 + $0x38] sm:$0xff]
  %v230 = vld [vmem:[%s3 + $0x40] sm:$0xff]
  %v231 = vld [vmem:[%s3 + $0x48] sm:$0xff]
  %v232 = vld [vmem:[%s4] sm:$0x1]
  %v234 = vlaneseq
  %v235 = vshrl.u32 %v234, 7
  %v236 = vsub.s32 0, %v235
  %v237 = vrot.slane %v232, %v236
  %vm239 = vcmask 654336
  %v241 = vsel %vm239, %v221, 0
  %243 = vmatprep.subr.mxu0 0.0
  %244 = vmatpush1.msra.mxu0 %v222
  %245 = vmatprep.subr.mxu0 0.0
  %246 = vmatpush1.msra.mxu0 %v223
  %247 = vmatprep.subr.mxu0 0.0
  %248 = vmatpush1.msra.mxu0 %v224
  %249 = vmatprep.subr.mxu0 0.0
  %250 = vmatpush1.msra.mxu0 %v225
  %251 = vmatprep.subr.mxu0 0.0
  %252 = vmatpush1.msra.mxu0 %v226
  %253 = vmatprep.subr.mxu0 0.0
  %254 = vmatpush1.msra.mxu0 %v227
  %255 = vmatprep.subr.mxu0 0.0
  %256 = vmatpush1.msra.mxu0 %v228
  %257 = vmatprep.subr.mxu0 0.0
  %258 = vmatpush1.msra.mxu0 %v229
  %259 = vmatprep.subr.mxu0 0.0
  %260 = vmatpush1.msra.mxu0 %v230
  %261 = vmatprep.subr.mxu0 0.0
  %262 = vmatpush1.msra.mxu0 %v231
  %263 = vmatprep.subr.mxu0 0.0
  %264 = vmatpush1.msra.mxu0 0.0
  %265 = vmatprep.subr.mxu0 0.0
  %266 = vmatpush1.msra.mxu0 0.0
  %267 = vmatprep.subr.mxu0 0.0
  %268 = vmatpush1.msra.mxu0 0.0
  %269 = vmatprep.subr.mxu0 0.0
  %270 = vmatpush1.msra.mxu0 0.0
  %271 = vmatprep.subr.mxu0 0.0
  %272 = vmatpush1.msra.mxu0 0.0
  %273 = vmatprep.subr.mxu0 0.0
  %274 = vmatpush1.msra.mxu0 0.0
  %275 = vmatprep.subr.mxu0 0.0
  %276 = vmatpush1.msra.mxu0 0.0
  %277 = vmatprep.subr.mxu0 0.0
  %278 = vmatpush1.msra.mxu0 0.0
  %279 = vmatprep.subr.mxu0 0.0
  %280 = vmatpush1.msra.mxu0 0.0
  %281 = vmatprep.subr.mxu0 0.0
  %282 = vmatpush1.msra.mxu0 0.0
  %283 = vmatprep.subr.mxu0 0.0
  %284 = vmatpush1.msra.mxu0 0.0
  %285 = vmatprep.subr.mxu0 0.0
  %286 = vmatpush1.msra.mxu0 0.0
  %287 = vmatprep.subr.mxu0 0.0
  %288 = vmatpush1.msra.mxu0 0.0
  %289 = vmatprep.subr.mxu0 0.0
  %290 = vmatpush1.msra.mxu0 0.0
  %291 = vmatprep.subr.mxu0 0.0
  %292 = vmatpush1.msra.mxu0 0.0
  %293 = vmatprep.subr.mxu0 0.0
  %294 = vmatpush1.msra.mxu0 0.0
  %295 = vmatprep.subr.mxu0 0.0
  %296 = vmatpush1.msra.mxu0 0.0
  %297 = vmatprep.subr.mxu0 0.0
  %298 = vmatpush1.msra.mxu0 0.0
  %299 = vmatprep.subr.mxu0 0.0
  %300 = vmatpush1.msra.mxu0 0.0
  %301 = vmatprep.subr.mxu0 0.0
  %302 = vmatpush1.msra.mxu0 0.0
  %303 = vmatprep.subr.mxu0 0.0
  %304 = vmatpush1.msra.mxu0 0.0
  %305 = vmatprep.subr.mxu0 0.0
  %306 = vmatpush1.msra.mxu0 0.0
  %307 = vmatprep.mubr.f32.mxu0 0.0
  %308 = vmatmul.mubr.f32.gmra.mrb[0].mxu0 %v241
  %v309 = vpop.f32.mrb[0].mxu0
  %v310 = vadd.f32 %v237, %v309
  %v311 = vpop.f32.mrb[0].mxu0
  %312 = vdwg.mxu0
  %v313 = vmax.f32 %v310, 0.0
  %314 = vst.msk [vmem:[#allocation4] sm:$0xff] %vm186, %v313
  %v315 = vld [vmem:[#allocation4] sm:$0x1]
  %v316 = vld [vmem:[#allocation4 + $0x1] sm:$0x1]
  %v317 = vld [vmem:[#allocation4 + $0x2] sm:$0x1]
  %v318 = vld [vmem:[#allocation4 + $0x3] sm:$0x1]
  %320 = vrot.lane.b32.xlu0 %v316, 32
  %v321 = vpop.permute.xlu0 %320
  %324 = vrot.lane.b32.xlu0 %v317, 64
  %v325 = vpop.permute.xlu0 %324
  %328 = vrot.lane.b32.xlu0 %v318, 96
  %v329 = vpop.permute.xlu0 %328
  %v331 = vsel %vm186, %v315, %v321
  %v332 = vsel %vm190, %v331, %v325
  %vm333 = vcmask 785408
  %v334 = vsel %vm333, %v332, %v329
  %v335 = vld [vmem:[#allocation4 + $0x4] sm:$0x1]
  %v336 = vld [vmem:[#allocation4 + $0x5] sm:$0x1]
  %v337 = vld [vmem:[#allocation4 + $0x6] sm:$0x1]
  %v338 = vld [vmem:[#allocation4 + $0x7] sm:$0x1]
  %340 = vrot.lane.b32.xlu0 %v336, 32
  %v341 = vpop.permute.xlu0 %340
  %344 = vrot.lane.b32.xlu0 %v337, 64
  %v345 = vpop.permute.xlu0 %344
  %348 = vrot.lane.b32.xlu0 %v338, 96
  %v349 = vpop.permute.xlu0 %348
  %v351 = vsel %vm186, %v335, %v341
  %v352 = vsel %vm190, %v351, %v345
  %v353 = vsel %vm333, %v352, %v349
  %v355 = vrot.slane %v353, 7
  %vm357 = vcmask 1040384
  %v358 = vsel %vm357, %v334, %v355
  %v359 = vld [vmem:[%s5] sm:$0xff]
  %v360 = vld [vmem:[%s5 + $0x8] sm:$0xff]
  %v361 = vld [vmem:[%s5 + $0x10] sm:$0xff]
  %v362 = vld [vmem:[%s5 + $0x18] sm:$0xff]
  %v363 = vld [vmem:[%s5 + $0x20] sm:$0xff]
  %v364 = vld [vmem:[%s5 + $0x28] sm:$0xff]
  %v365 = vld [vmem:[%s5 + $0x30] sm:$0xff]
  %v366 = vld [vmem:[%s5 + $0x38] sm:$0xff]
  %v367 = vld [vmem:[%s5 + $0x40] sm:$0xff]
  %v368 = vld [vmem:[%s5 + $0x48] sm:$0xff]
  %v369 = vld [vmem:[%s5 + $0x50] sm:$0xff]
  %v370 = vld [vmem:[%s5 + $0x58] sm:$0xff]
  %v371 = vld [vmem:[%s5 + $0x60] sm:$0xff]
  %v372 = vld [vmem:[%s5 + $0x68] sm:$0xff]
  %v373 = vld [vmem:[%s5 + $0x70] sm:$0xff]
  %v374 = vld [vmem:[%s5 + $0x78] sm:$0xff]
  %v375 = vld [vmem:[%s6] sm:$0x1]
  %v377 = vlaneseq
  %v378 = vshrl.u32 %v377, 7
  %v379 = vsub.s32 0, %v378
  %v380 = vrot.slane %v375, %v379
  %382 = vmatprep.subr.mxu0 0.0
  %383 = vmatpush1.msra.mxu0 %v359
  %384 = vmatprep.subr.mxu0 0.0
  %385 = vmatpush1.msra.mxu0 %v360
  %386 = vmatprep.subr.mxu0 0.0
  %387 = vmatpush1.msra.mxu0 %v361
  %388 = vmatprep.subr.mxu0 0.0
  %389 = vmatpush1.msra.mxu0 %v362
  %390 = vmatprep.subr.mxu0 0.0
  %391 = vmatpush1.msra.mxu0 %v363
  %392 = vmatprep.subr.mxu0 0.0
  %393 = vmatpush1.msra.mxu0 %v364
  %394 = vmatprep.subr.mxu0 0.0
  %395 = vmatpush1.msra.mxu0 %v365
  %396 = vmatprep.subr.mxu0 0.0
  %397 = vmatpush1.msra.mxu0 %v366
  %398 = vmatprep.subr.mxu0 0.0
  %399 = vmatpush1.msra.mxu0 %v367
  %400 = vmatprep.subr.mxu0 0.0
  %401 = vmatpush1.msra.mxu0 %v368
  %402 = vmatprep.subr.mxu0 0.0
  %403 = vmatpush1.msra.mxu0 %v369
  %404 = vmatprep.subr.mxu0 0.0
  %405 = vmatpush1.msra.mxu0 %v370
  %406 = vmatprep.subr.mxu0 0.0
  %407 = vmatpush1.msra.mxu0 %v371
  %408 = vmatprep.subr.mxu0 0.0
  %409 = vmatpush1.msra.mxu0 %v372
  %410 = vmatprep.subr.mxu0 0.0
  %411 = vmatpush1.msra.mxu0 %v373
  %412 = vmatprep.subr.mxu0 0.0
  %413 = vmatpush1.msra.mxu0 %v374
  %414 = vmatprep.subr.mxu0 0.0
  %415 = vmatpush1.msra.mxu0 0.0
  %416 = vmatprep.subr.mxu0 0.0
  %417 = vmatpush1.msra.mxu0 0.0
  %418 = vmatprep.subr.mxu0 0.0
  %419 = vmatpush1.msra.mxu0 0.0
  %420 = vmatprep.subr.mxu0 0.0
  %421 = vmatpush1.msra.mxu0 0.0
  %422 = vmatprep.subr.mxu0 0.0
  %423 = vmatpush1.msra.mxu0 0.0
  %424 = vmatprep.subr.mxu0 0.0
  %425 = vmatpush1.msra.mxu0 0.0
  %426 = vmatprep.subr.mxu0 0.0
  %427 = vmatpush1.msra.mxu0 0.0
  %428 = vmatprep.subr.mxu0 0.0
  %429 = vmatpush1.msra.mxu0 0.0
  %430 = vmatprep.subr.mxu0 0.0
  %431 = vmatpush1.msra.mxu0 0.0
  %432 = vmatprep.subr.mxu0 0.0
  %433 = vmatpush1.msra.mxu0 0.0
  %434 = vmatprep.subr.mxu0 0.0
  %435 = vmatpush1.msra.mxu0 0.0
  %436 = vmatprep.subr.mxu0 0.0
  %437 = vmatpush1.msra.mxu0 0.0
  %438 = vmatprep.subr.mxu0 0.0
  %439 = vmatpush1.msra.mxu0 0.0
  %440 = vmatprep.subr.mxu0 0.0
  %441 = vmatpush1.msra.mxu0 0.0
  %442 = vmatprep.subr.mxu0 0.0
  %443 = vmatpush1.msra.mxu0 0.0
  %444 = vmatprep.subr.mxu0 0.0
  %445 = vmatpush1.msra.mxu0 0.0
  %446 = vmatprep.mubr.f32.mxu0 0.0
  %447 = vmatmul.mubr.f32.gmra.mrb[0].mxu0 %v358
  %v448 = vpop.f32.mrb[0].mxu0
  %v449 = vadd.f32 %v380, %v448
  %v450 = vpop.f32.mrb[0].mxu0
  %451 = vdwg.mxu0
  %v452 = vmax.f32 %v449, 0.0
  %v453 = vld [vmem:[%s7] sm:$0xff]
  %v454 = vld [vmem:[%s7 + $0x8] sm:$0xff]
  %v455 = vld [vmem:[%s7 + $0x10] sm:$0xff]
  %v456 = vld [vmem:[%s7 + $0x18] sm:$0xff]
  %v457 = vld [vmem:[%s8] sm:$0x1]
  %v459 = vlaneseq
  %v460 = vshrl.u32 %v459, 7
  %v461 = vsub.s32 0, %v460
  %v462 = vrot.slane %v457, %v461
  %v465 = vsel %vm186, %v452, 0
  %467 = vmatprep.subr.mxu0 0.0
  %468 = vmatpush1.msra.mxu0 %v453
  %469 = vmatprep.subr.mxu0 0.0
  %470 = vmatpush1.msra.mxu0 %v454
  %471 = vmatprep.subr.mxu0 0.0
  %472 = vmatpush1.msra.mxu0 %v455
  %473 = vmatprep.subr.mxu0 0.0
  %474 = vmatpush1.msra.mxu0 %v456
  %475 = vmatprep.subr.mxu0 0.0
  %476 = vmatpush1.msra.mxu0 0.0
  %477 = vmatprep.subr.mxu0 0.0
  %478 = vmatpush1.msra.mxu0 0.0
  %479 = vmatprep.subr.mxu0 0.0
  %480 = vmatpush1.msra.mxu0 0.0
  %481 = vmatprep.subr.mxu0 0.0
  %482 = vmatpush1.msra.mxu0 0.0
  %483 = vmatprep.subr.mxu0 0.0
  %484 = vmatpush1.msra.mxu0 0.0
  %485 = vmatprep.subr.mxu0 0.0
  %486 = vmatpush1.msra.mxu0 0.0
  %487 = vmatprep.subr.mxu0 0.0
  %488 = vmatpush1.msra.mxu0 0.0
  %489 = vmatprep.subr.mxu0 0.0
  %490 = vmatpush1.msra.mxu0 0.0
  %491 = vmatprep.subr.mxu0 0.0
  %492 = vmatpush1.msra.mxu0 0.0
  %493 = vmatprep.subr.mxu0 0.0
  %494 = vmatpush1.msra.mxu0 0.0
  %495 = vmatprep.subr.mxu0 0.0
  %496 = vmatpush1.msra.mxu0 0.0
  %497 = vmatprep.subr.mxu0 0.0
  %498 = vmatpush1.msra.mxu0 0.0
  %499 = vmatprep.subr.mxu0 0.0
  %500 = vmatpush1.msra.mxu0 0.0
  %501 = vmatprep.subr.mxu0 0.0
  %502 = vmatpush1.msra.mxu0 0.0
  %503 = vmatprep.subr.mxu0 0.0
  %504 = vmatpush1.msra.mxu0 0.0
  %505 = vmatprep.subr.mxu0 0.0
  %506 = vmatpush1.msra.mxu0 0.0
  %507 = vmatprep.subr.mxu0 0.0
  %508 = vmatpush1.msra.mxu0 0.0
  %509 = vmatprep.subr.mxu0 0.0
  %510 = vmatpush1.msra.mxu0 0.0
  %511 = vmatprep.subr.mxu0 0.0
  %512 = vmatpush1.msra.mxu0 0.0
  %513 = vmatprep.subr.mxu0 0.0
  %514 = vmatpush1.msra.mxu0 0.0
  %515 = vmatprep.subr.mxu0 0.0
  %516 = vmatpush1.msra.mxu0 0.0
  %517 = vmatprep.subr.mxu0 0.0
  %518 = vmatpush1.msra.mxu0 0.0
  %519 = vmatprep.subr.mxu0 0.0
  %520 = vmatpush1.msra.mxu0 0.0
  %521 = vmatprep.subr.mxu0 0.0
  %522 = vmatpush1.msra.mxu0 0.0
  %523 = vmatprep.subr.mxu0 0.0
  %524 = vmatpush1.msra.mxu0 0.0
  %525 = vmatprep.subr.mxu0 0.0
  %526 = vmatpush1.msra.mxu0 0.0
  %527 = vmatprep.subr.mxu0 0.0
  %528 = vmatpush1.msra.mxu0 0.0
  %529 = vmatprep.subr.mxu0 0.0
  %530 = vmatpush1.msra.mxu0 0.0
  %531 = vmatprep.mubr.f32.mxu0 0.0
  %532 = vmatmul.mubr.f32.gmra.mrb[0].mxu0 %v465
  %v533 = vpop.f32.mrb[0].mxu0
  %v534 = vadd.f32 %v462, %v533
  %v535 = vpop.f32.mrb[0].mxu0
  %536 = vdwg.mxu0
  %vm537 = vcmask 9216
  %v538 = vsel %vm537, %v534, -inf
  %539 = vmax.xlane.f32.xlu0 %v538
  %v540 = vpop.xlane.xlu0 %539
  %v541 = vsub.f32 %v534, %v540
  %v542 = vmul.f32 %v541, 1.442695
  %v543 = vpow.pop %v542
  %v544 = vsel %vm537, %v543, 0.0
  %545 = vadd.xlane.f32.xlu0 %v544
  %v546 = vpop.xlane.xlu0 %545
  %v547 = vlog2.pop %v546
  %v548 = vmul.f32 %v547, 0.6931472
  %v549 = vadd.f32 %v548, %v540
  %v550 = vsub.f32 %v534, %v549
  %551 = vst.msk [vmem:[%s9] sm:$0x3] %vm537, %v550
  // Predicated region
  $region38: #{classifier_forward.3} parent=0 // pred_check
    _
  $region39: #{classifier_forward.3} parent=0 // pred_check_branch
    %553 = sbr.rel (0) target = $region41
  $region40: #{classifier_forward.3} parent=0 // pred_region
    _
  $region41: #{classifier_forward.3} parent=0 // pred_fallthru
    _
  // Predicated region
  $region42: #{classifier_forward.3} parent=0 // pred_check
    _
  $region43: #{classifier_forward.3} parent=0 // pred_check_branch
    %555 = sbr.rel (0) target = $region45
  $region44: #{classifier_forward.3} parent=0 // pred_region
    _
  $region45: #{classifier_forward.3} parent=0 // pred_fallthru
    _

</llo_original>
